<compile_context>
chip_gen: v6e
topology: v6e:2x2x1
jax: 0.10.0
libtpu: 0.0.40
codegen_flags: <defaults>
</compile_context>

<pallas_src>
import functools

import numpy as np

import jax
import jax.numpy as jnp
from jax import lax
from jax.experimental import pallas as pl
from jax.experimental.pallas import tpu as pltpu


NUM_CLASS = 3
CE_WEIGHT, DICE_WEIGHT, EDGE_WEIGHT = 2.0, 1.0, 5.0
DICE_CLASS_WEIGHTS = (0.001, 10.0, 100.0)   # class_weights buffer in __init__
DICE_EPS = 1e-6
_LANES = 128


# ---------------------------------------------------------------------------
# separable zero-padded 3-point box sums
# ---------------------------------------------------------------------------
def _box_z(u):
    """u[.., z-1] + u[.., z] + u[.., z+1] with zero padding (lane axis)."""
    rows, zz = u.shape
    zcol = jnp.zeros((rows, 1), jnp.float32)
    plus = jnp.concatenate([u[:, 1:], zcol], axis=1)          # u[., z+1]
    minus = jnp.concatenate([zcol, u[:, : zz - 1]], axis=1)   # u[., z-1]
    return u + plus + minus


def _box_y(u, Y):
    """3-point box sum along y (sublane axis); rows are ordered x*Y + y."""
    rows, zz = u.shape
    zrow = jnp.zeros((1, zz), jnp.float32)
    plus = jnp.concatenate([u[1:, :], zrow], axis=0)            # u[r+1]
    minus = jnp.concatenate([zrow, u[: rows - 1, :]], axis=0)   # u[r-1]
    y = lax.broadcasted_iota(jnp.int32, (rows, 1), 0) % Y
    plus = jnp.where(y < Y - 1, plus, 0.0)    # r+1 crossed into the next x-plane
    minus = jnp.where(y >= 1, minus, 0.0)     # r-1 crossed into the previous one
    return u + plus + minus


# ---------------------------------------------------------------------------
# Pallas kernel: one (batch, x-slab) tile per grid step, partial sums out
# ---------------------------------------------------------------------------
def _unified_loss_kernel(pred_ref, oh_ref, lab_ref, ohl_ref, ohr_ref, out_ref,
                         *, C, TXP, Y, n_slabs, n_rows):
    s = pl.program_id(1)
    R = TXP * Y

    # ---- dense per-class planes (each (R, Z)); cast to f32 after load ----
    p = [pred_ref[0, c, :, :].astype(jnp.float32) for c in range(C)]
    oh = [oh_ref[0, c, :, :].astype(jnp.float32) for c in range(C)]
    lab = lab_ref[0, :, :]

    # ---- softmax over the (unrolled) class axis + log-sum-exp ----
    m = p[0]
    for c in range(1, C):
        m = jnp.maximum(m, p[c])
    e = [jnp.exp(p[c] - m) for c in range(C)]
    se = e[0]
    for c in range(1, C):
        se = se + e[c]
    inv = 1.0 / se               # exact: dice class weight 100 amplifies error
    lse = m + jnp.log(se)

    # ---- per-class partial sums for dice + weighted cross entropy ----
    inter, denom, ssum, cenum, ceden = [], [], [], [], []
    for c in range(C):
        sm = e[c] * inv
        inter.append(jnp.sum(sm * oh[c]))
        denom.append(jnp.sum(sm * sm) + jnp.sum(oh[c] * oh[c]))
        ssum.append(jnp.sum(sm))
        msk = lab == c                      # ignore_index=-100 never matches
        cenum.append(jnp.sum(jnp.where(msk, lse - p[c], 0.0)))
        ceden.append(jnp.sum(msk.astype(jnp.float32)))

    # ---- edge loss: sum |Lap(1 - sum_c onehot)| over the slab ----
    dsum = oh[0]
    for c in range(1, C):
        dsum = dsum + oh[c]
    d = 1.0 - dsum
    byz = _box_y(_box_z(d), Y)              # box over the (y, z) neighbourhood

    def halo_byz(h_ref, valid):
        acc = h_ref[0, 0, :, :].astype(jnp.float32)
        for c in range(1, C):
            acc = acc + h_ref[0, c, :, :].astype(jnp.float32)
        return _box_y(_box_z(1.0 - acc), Y) * valid

    byz_l = halo_byz(ohl_ref, (s > 0).astype(jnp.float32))
    byz_r = halo_byz(ohr_ref, (s < n_slabs - 1).astype(jnp.float32))

    # x-direction box: neighbours are Y rows away; halos extend the slab.
    ext = jnp.concatenate([byz_l, byz, byz_r], axis=0)        # (R + 2Y, Z)
    bsum = ext[0:R, :] + ext[Y:Y + R, :] + ext[2 * Y:2 * Y + R, :]
    lap = 27.0 * d - bsum
    edge_sum = jnp.sum(jnp.abs(lap))

    # ---- one lane-dense (n_rows, 128) partial-stats tile per grid block ----
    stats = inter + denom + ssum + cenum + ceden + [edge_sum]
    row = lax.broadcasted_iota(jnp.int32, (n_rows, 1), 0)
    tile = jnp.zeros((n_rows, _LANES), jnp.float32)
    for i, v in enumerate(stats):
        tile = jnp.where(row == i, v, tile)
    out_ref[...] = jnp.reshape(tile, (1, 1, n_rows, _LANES))


# ---------------------------------------------------------------------------
# Wrapper: contiguous reshapes, slab tiling, tiny final reduction in JAX
# ---------------------------------------------------------------------------
def _pick_slab_planes(X, Y, Z, C, itemsize, budget_bytes=2 * 1024 * 1024):
    best = 1
    for t in range(1, X + 1):
        if X % t == 0 and (t == 1 or C * t * Y * Z * itemsize <= budget_bytes):
            best = t
    return best


@functools.partial(jax.jit, static_argnames=("slab_planes",))
def unified_segmentation_loss(pred, prediction, target, target_onehot,
                              slab_planes=None):
    """Mirrors UnifiedSegmentationLoss.forward(pred, prediction, target, target_onehot)."""
    del prediction  # unused by the PyTorch forward as well
    N, C, X, Y, Z = pred.shape
    if Y % 8 != 0:
        # TODO(synk): pad Y (or fold Y*Z into lanes) for Y not a multiple of 8.
        raise NotImplementedError("Pallas path requires Y % 8 == 0")

    if slab_planes is None:
        slab_planes = _pick_slab_planes(X, Y, Z, C, pred.dtype.itemsize)
    assert X % slab_planes == 0, "slab_planes must divide X"
    TXP = slab_planes
    n_slabs = X // TXP

    n_stats = 5 * C + 1
    n_rows = max(8, ((n_stats + 7) // 8) * 8)

    # contiguous reshapes only; keep native dtypes (cast to f32 inside kernel)
    pred_r = pred.reshape(N, C, X * Y, Z)
    oh_r = target_onehot.reshape(N, C, X * Y, Z)
    lab_r = target.reshape(N, X * Y, Z).astype(jnp.int32)

    kernel = functools.partial(
        _unified_loss_kernel, C=C, TXP=TXP, Y=Y, n_slabs=n_slabs, n_rows=n_rows)

    slab_spec = pl.BlockSpec((1, C, TXP * Y, Z), lambda n, s: (n, 0, s, 0))
    halo_l_spec = pl.BlockSpec(
        (1, C, Y, Z), lambda n, s: (n, 0, jnp.maximum(s * TXP - 1, 0), 0))
    halo_r_spec = pl.BlockSpec(
        (1, C, Y, Z), lambda n, s: (n, 0, jnp.minimum((s + 1) * TXP, X - 1), 0))

    out = pl.pallas_call(
        kernel,
        out_shape=jax.ShapeDtypeStruct((N, n_slabs, n_rows, _LANES), jnp.float32),
        grid=(N, n_slabs),
        in_specs=[
            slab_spec,                                               # pred slab
            slab_spec,                                               # one-hot slab
            pl.BlockSpec((1, TXP * Y, Z), lambda n, s: (n, s, 0)),   # labels slab
            halo_l_spec,                                             # one-hot plane before slab
            halo_r_spec,                                             # one-hot plane after slab
        ],
        out_specs=pl.BlockSpec((1, 1, n_rows, _LANES), lambda n, s: (n, s, 0, 0)),
        compiler_params=pltpu.CompilerParams(
            dimension_semantics=("parallel", "parallel"),
            vmem_limit_bytes=40 * 1024 * 1024,
        ),
    )(pred_r, oh_r, lab_r, oh_r, oh_r)

    # ---- tiny final reduction + loss combination (plain JAX) ----
    stats = jnp.sum(out[..., 0], axis=(0, 1))            # (n_rows,)
    inter = stats[0:C]
    den = stats[C:2 * C]
    ssum = stats[2 * C:3 * C]
    cen = stats[3 * C:4 * C]
    ced = stats[4 * C:5 * C]
    edge_sum = stats[5 * C]

    w = jnp.array(DICE_CLASS_WEIGHTS[:C], jnp.float32)
    dice_loss = 1.0 - jnp.mean(2.0 * (w * inter) / jnp.maximum(den, DICE_EPS))

    Mf = jnp.float32(N * X * Y * Z)
    cw = (Mf - ssum) / ssum
    # guard: an all-ignore_index input would otherwise give 0/0 -> NaN
    ce_loss = jnp.sum(cw * cen) / jnp.maximum(jnp.sum(cw * ced), jnp.float32(1e-20))

    edge_loss = edge_sum / Mf

    total = CE_WEIGHT * ce_loss + DICE_WEIGHT * dice_loss + EDGE_WEIGHT * edge_loss
    return total, {"ce_loss": ce_loss, "dice_loss": dice_loss, "edge_loss": edge_loss}


# ---------------------------------------------------------------------------
# Pure-JAX reference (mirrors the PyTorch module) for a sanity check
# ---------------------------------------------------------------------------
def _reference_loss(pred, target, target_onehot):
    C = pred.shape[1]
    sm = jax.nn.softmax(pred, axis=1)

    base = jnp.full((3, 3, 3), -1.0, jnp.float32).at[1, 1, 1].set(26.0)
    kern = jnp.tile(base[None, None], (1, C, 1, 1, 1))
    dn = lax.conv_dimension_numbers(pred.shape, kern.shape, ("NCDHW", "OIDHW", "NCDHW"))

    def conv(x):
        return lax.conv_general_dilated(
            x, kern, window_strides=(1, 1, 1), padding=[(1, 1)] * 3,
            dimension_numbers=dn, precision=lax.Precision.HIGHEST,
        )

    edge = jnp.mean(jnp.abs(conv(sm) - conv(target_onehot)))

    smf = jnp.transpose(sm, (1, 0, 2, 3, 4)).reshape(C, -1)
    tf = jnp.transpose(target_onehot, (1, 0, 2, 3, 4)).reshape(C, -1)
    w = jnp.array(DICE_CLASS_WEIGHTS, jnp.float32)
    inter = jnp.sum(smf * tf, axis=-1)
    den = jnp.sum(smf * smf, axis=-1) + jnp.sum(tf * tf, axis=-1)
    dice = 1.0 - jnp.mean(2.0 * (w * inter) / jnp.maximum(den, DICE_EPS))

    M = smf.shape[1]
    S = jnp.sum(smf, axis=-1)
    cw = (M - S) / S
    logp = jax.nn.log_softmax(pred, axis=1)
    oh = jax.nn.one_hot(target, C, axis=1, dtype=jnp.float32)
    nll = -jnp.sum(oh * logp, axis=1)
    wt = cw[target]
    ce = jnp.sum(wt * nll) / jnp.sum(wt)

    total = CE_WEIGHT * ce + DICE_WEIGHT * dice + EDGE_WEIGHT * edge
    return total, ce, dice, edge


if __name__ == "__main__":
    key = jax.random.PRNGKey(0)
    k1, k2, k3 = jax.random.split(key, 3)

    N, C, X, Y, Z = 2, NUM_CLASS, 8, 8, 8
    pred = jax.random.normal(k1, (N, C, X, Y, Z), jnp.float32)
    target = jax.random.randint(k2, (N, X, Y, Z), 0, C, jnp.int32)
    # soft target probabilities (the module only needs an N x C x spatial float tensor)
    target_onehot = jax.random.uniform(k3, (N, C, X, Y, Z), dtype=jnp.float32)
    prediction = jnp.zeros_like(pred)  # unused by forward; kept for signature parity

    # slab_planes=2 -> four x-slabs per batch element, exercising the halo path.
    total, parts = unified_segmentation_loss(
        pred, prediction, target, target_onehot, slab_planes=2)
    jax.block_until_ready(total)

    ref_total, ref_ce, ref_dice, ref_edge = _reference_loss(pred, target, target_onehot)
    np.testing.assert_allclose(np.array(total), np.array(ref_total), rtol=2e-2, atol=2e-2)
    np.testing.assert_allclose(
        np.array(parts["ce_loss"]), np.array(ref_ce), rtol=2e-2, atol=2e-2)
    np.testing.assert_allclose(
        np.array(parts["dice_loss"]), np.array(ref_dice), rtol=2e-2, atol=2e-2)
    np.testing.assert_allclose(
        np.array(parts["edge_loss"]), np.array(ref_edge), rtol=2e-2, atol=2e-2)

    print("KERNEL_OK")
</pallas_src>

<mosaic_0001>
module attributes {stable_mosaic.version = 11 : i64} {
  func.func @_unified_loss_kernel(%arg0: i32, %arg1: i32, %arg2: memref<1x3x16x8xf32, #tpu.memory_space<vmem>>, %arg3: memref<1x3x16x8xf32, #tpu.memory_space<vmem>>, %arg4: memref<1x16x8xi32, #tpu.memory_space<vmem>>, %arg5: memref<1x3x8x8xf32, #tpu.memory_space<vmem>>, %arg6: memref<1x3x8x8xf32, #tpu.memory_space<vmem>>, %arg7: memref<1x1x16x128xf32, #tpu.memory_space<vmem>>) attributes {dimension_semantics = [#tpu.dimension_semantics<parallel>, #tpu.dimension_semantics<parallel>], iteration_bounds = array<i64: 2, 4>, scalar_prefetch = 0 : i64, scratch_operands = 0 : i64, tpu.core_type = #tpu.core_type<tc>, window_params = [{transform_indices = @transform_0, window_bounds = array<i64: 1, 3, 16, 8>}, {transform_indices = @transform_1, window_bounds = array<i64: 1, 3, 16, 8>}, {transform_indices = @transform_2, window_bounds = array<i64: 1, 16, 8>}, {transform_indices = @transform_3, window_bounds = array<i64: 1, 3, 8, 8>}, {transform_indices = @transform_4, window_bounds = array<i64: 1, 3, 8, 8>}, {transform_indices = @transform_5, window_bounds = array<i64: 1, 1, 16, 128>}]} {
    %c0 = arith.constant 0 : index
    %c0_0 = arith.constant 0 : index
    %c0_1 = arith.constant 0 : index
    %c0_2 = arith.constant 0 : index
    %0 = vector.load %arg2[%c0, %c0_0, %c0_1, %c0_2] : memref<1x3x16x8xf32, #tpu.memory_space<vmem>>, vector<1x1x16x8xf32>
    %1 = vector.shape_cast %0 : vector<1x1x16x8xf32> to vector<16x8xf32>
    %c0_3 = arith.constant 0 : index
    %c1 = arith.constant 1 : index
    %c0_4 = arith.constant 0 : index
    %c0_5 = arith.constant 0 : index
    %2 = vector.load %arg2[%c0_3, %c1, %c0_4, %c0_5] : memref<1x3x16x8xf32, #tpu.memory_space<vmem>>, vector<1x1x16x8xf32>
    %3 = vector.shape_cast %2 : vector<1x1x16x8xf32> to vector<16x8xf32>
    %c0_6 = arith.constant 0 : index
    %c2 = arith.constant 2 : index
    %c0_7 = arith.constant 0 : index
    %c0_8 = arith.constant 0 : index
    %4 = vector.load %arg2[%c0_6, %c2, %c0_7, %c0_8] : memref<1x3x16x8xf32, #tpu.memory_space<vmem>>, vector<1x1x16x8xf32>
    %5 = vector.shape_cast %4 : vector<1x1x16x8xf32> to vector<16x8xf32>
    %c0_9 = arith.constant 0 : index
    %c0_10 = arith.constant 0 : index
    %c0_11 = arith.constant 0 : index
    %c0_12 = arith.constant 0 : index
    %6 = vector.load %arg3[%c0_9, %c0_10, %c0_11, %c0_12] : memref<1x3x16x8xf32, #tpu.memory_space<vmem>>, vector<1x1x16x8xf32>
    %7 = vector.shape_cast %6 : vector<1x1x16x8xf32> to vector<16x8xf32>
    %c0_13 = arith.constant 0 : index
    %c1_14 = arith.constant 1 : index
    %c0_15 = arith.constant 0 : index
    %c0_16 = arith.constant 0 : index
    %8 = vector.load %arg3[%c0_13, %c1_14, %c0_15, %c0_16] : memref<1x3x16x8xf32, #tpu.memory_space<vmem>>, vector<1x1x16x8xf32>
    %9 = vector.shape_cast %8 : vector<1x1x16x8xf32> to vector<16x8xf32>
    %c0_17 = arith.constant 0 : index
    %c2_18 = arith.constant 2 : index
    %c0_19 = arith.constant 0 : index
    %c0_20 = arith.constant 0 : index
    %10 = vector.load %arg3[%c0_17, %c2_18, %c0_19, %c0_20] : memref<1x3x16x8xf32, #tpu.memory_space<vmem>>, vector<1x1x16x8xf32>
    %11 = vector.shape_cast %10 : vector<1x1x16x8xf32> to vector<16x8xf32>
    %c0_21 = arith.constant 0 : index
    %c0_22 = arith.constant 0 : index
    %c0_23 = arith.constant 0 : index
    %12 = vector.load %arg4[%c0_21, %c0_22, %c0_23] : memref<1x16x8xi32, #tpu.memory_space<vmem>>, vector<1x16x8xi32>
    %13 = vector.shape_cast %12 : vector<1x16x8xi32> to vector<16x8xi32>
    %14 = arith.maximumf %1, %3 : vector<16x8xf32>
    %15 = arith.maximumf %14, %5 : vector<16x8xf32>
    %16 = arith.subf %1, %15 : vector<16x8xf32>
    %17 = math.exp %16 : vector<16x8xf32>
    %18 = arith.subf %3, %15 : vector<16x8xf32>
    %19 = math.exp %18 : vector<16x8xf32>
    %20 = arith.subf %5, %15 : vector<16x8xf32>
    %21 = math.exp %20 : vector<16x8xf32>
    %22 = arith.addf %17, %19 : vector<16x8xf32>
    %23 = arith.addf %22, %21 : vector<16x8xf32>
    %cst = arith.constant 1.000000e+00 : f32
    %24 = vector.broadcast %cst : f32 to vector<16x8xf32>
    %25 = arith.divf %24, %23 : vector<16x8xf32>
    %26 = math.log %23 : vector<16x8xf32>
    %27 = arith.addf %15, %26 : vector<16x8xf32>
    %28 = arith.mulf %17, %25 : vector<16x8xf32>
    %29 = arith.mulf %28, %7 : vector<16x8xf32>
    %30 = vector.shape_cast %29 : vector<16x8xf32> to vector<1x16x8xf32>
    %cst_24 = arith.constant dense<0.000000e+00> : vector<1xf32>
    %31 = vector.multi_reduction <add>, %30, %cst_24 [1, 2] : vector<1x16x8xf32> to vector<1xf32>
    %32 = vector.shape_cast %31 : vector<1xf32> to vector<1x1x1xf32>
    %33 = vector.extract %32[0, 0, 0] : f32 from vector<1x1x1xf32>
    %34 = arith.mulf %28, %28 : vector<16x8xf32>
    %35 = vector.shape_cast %34 : vector<16x8xf32> to vector<1x16x8xf32>
    %cst_25 = arith.constant dense<0.000000e+00> : vector<1xf32>
    %36 = vector.multi_reduction <add>, %35, %cst_25 [1, 2] : vector<1x16x8xf32> to vector<1xf32>
    %37 = vector.shape_cast %36 : vector<1xf32> to vector<1x1x1xf32>
    %38 = vector.extract %37[0, 0, 0] : f32 from vector<1x1x1xf32>
    %39 = arith.mulf %7, %7 : vector<16x8xf32>
    %40 = vector.shape_cast %39 : vector<16x8xf32> to vector<1x16x8xf32>
    %cst_26 = arith.constant dense<0.000000e+00> : vector<1xf32>
    %41 = vector.multi_reduction <add>, %40, %cst_26 [1, 2] : vector<1x16x8xf32> to vector<1xf32>
    %42 = vector.shape_cast %41 : vector<1xf32> to vector<1x1x1xf32>
    %43 = vector.extract %42[0, 0, 0] : f32 from vector<1x1x1xf32>
    %44 = arith.addf %38, %43 : f32
    %45 = vector.shape_cast %28 : vector<16x8xf32> to vector<1x16x8xf32>
    %cst_27 = arith.constant dense<0.000000e+00> : vector<1xf32>
    %46 = vector.multi_reduction <add>, %45, %cst_27 [1, 2] : vector<1x16x8xf32> to vector<1xf32>
    %47 = vector.shape_cast %46 : vector<1xf32> to vector<1x1x1xf32>
    %48 = vector.extract %47[0, 0, 0] : f32 from vector<1x1x1xf32>
    %c0_i32 = arith.constant 0 : i32
    %49 = vector.broadcast %c0_i32 : i32 to vector<16x8xi32>
    %50 = arith.cmpi eq, %13, %49 : vector<16x8xi32>
    %51 = arith.subf %27, %1 : vector<16x8xf32>
    %cst_28 = arith.constant 0.000000e+00 : f32
    %52 = vector.broadcast %cst_28 : f32 to vector<16x8xf32>
    %53 = arith.select %50, %51, %52 : vector<16x8xi1>, vector<16x8xf32>
    %54 = vector.shape_cast %53 : vector<16x8xf32> to vector<1x16x8xf32>
    %cst_29 = arith.constant dense<0.000000e+00> : vector<1xf32>
    %55 = vector.multi_reduction <add>, %54, %cst_29 [1, 2] : vector<1x16x8xf32> to vector<1xf32>
    %56 = vector.shape_cast %55 : vector<1xf32> to vector<1x1x1xf32>
    %57 = vector.extract %56[0, 0, 0] : f32 from vector<1x1x1xf32>
    %58 = arith.extui %50 : vector<16x8xi1> to vector<16x8xi32>
    %59 = arith.sitofp %58 : vector<16x8xi32> to vector<16x8xf32>
    %60 = vector.shape_cast %59 : vector<16x8xf32> to vector<1x16x8xf32>
    %cst_30 = arith.constant dense<0.000000e+00> : vector<1xf32>
    %61 = vector.multi_reduction <add>, %60, %cst_30 [1, 2] : vector<1x16x8xf32> to vector<1xf32>
    %62 = vector.shape_cast %61 : vector<1xf32> to vector<1x1x1xf32>
    %63 = vector.extract %62[0, 0, 0] : f32 from vector<1x1x1xf32>
    %64 = arith.mulf %19, %25 : vector<16x8xf32>
    %65 = arith.mulf %64, %9 : vector<16x8xf32>
    %66 = vector.shape_cast %65 : vector<16x8xf32> to vector<1x16x8xf32>
    %cst_31 = arith.constant dense<0.000000e+00> : vector<1xf32>
    %67 = vector.multi_reduction <add>, %66, %cst_31 [1, 2] : vector<1x16x8xf32> to vector<1xf32>
    %68 = vector.shape_cast %67 : vector<1xf32> to vector<1x1x1xf32>
    %69 = vector.extract %68[0, 0, 0] : f32 from vector<1x1x1xf32>
    %70 = arith.mulf %64, %64 : vector<16x8xf32>
    %71 = vector.shape_cast %70 : vector<16x8xf32> to vector<1x16x8xf32>
    %cst_32 = arith.constant dense<0.000000e+00> : vector<1xf32>
    %72 = vector.multi_reduction <add>, %71, %cst_32 [1, 2] : vector<1x16x8xf32> to vector<1xf32>
    %73 = vector.shape_cast %72 : vector<1xf32> to vector<1x1x1xf32>
    %74 = vector.extract %73[0, 0, 0] : f32 from vector<1x1x1xf32>
    %75 = arith.mulf %9, %9 : vector<16x8xf32>
    %76 = vector.shape_cast %75 : vector<16x8xf32> to vector<1x16x8xf32>
    %cst_33 = arith.constant dense<0.000000e+00> : vector<1xf32>
    %77 = vector.multi_reduction <add>, %76, %cst_33 [1, 2] : vector<1x16x8xf32> to vector<1xf32>
    %78 = vector.shape_cast %77 : vector<1xf32> to vector<1x1x1xf32>
    %79 = vector.extract %78[0, 0, 0] : f32 from vector<1x1x1xf32>
    %80 = arith.addf %74, %79 : f32
    %81 = vector.shape_cast %64 : vector<16x8xf32> to vector<1x16x8xf32>
    %cst_34 = arith.constant dense<0.000000e+00> : vector<1xf32>
    %82 = vector.multi_reduction <add>, %81, %cst_34 [1, 2] : vector<1x16x8xf32> to vector<1xf32>
    %83 = vector.shape_cast %82 : vector<1xf32> to vector<1x1x1xf32>
    %84 = vector.extract %83[0, 0, 0] : f32 from vector<1x1x1xf32>
    %c1_i32 = arith.constant 1 : i32
    %85 = vector.broadcast %c1_i32 : i32 to vector<16x8xi32>
    %86 = arith.cmpi eq, %13, %85 : vector<16x8xi32>
    %87 = arith.subf %27, %3 : vector<16x8xf32>
    %cst_35 = arith.constant 0.000000e+00 : f32
    %88 = vector.broadcast %cst_35 : f32 to vector<16x8xf32>
    %89 = arith.select %86, %87, %88 : vector<16x8xi1>, vector<16x8xf32>
    %90 = vector.shape_cast %89 : vector<16x8xf32> to vector<1x16x8xf32>
    %cst_36 = arith.constant dense<0.000000e+00> : vector<1xf32>
    %91 = vector.multi_reduction <add>, %90, %cst_36 [1, 2] : vector<1x16x8xf32> to vector<1xf32>
    %92 = vector.shape_cast %91 : vector<1xf32> to vector<1x1x1xf32>
    %93 = vector.extract %92[0, 0, 0] : f32 from vector<1x1x1xf32>
    %94 = arith.extui %86 : vector<16x8xi1> to vector<16x8xi32>
    %95 = arith.sitofp %94 : vector<16x8xi32> to vector<16x8xf32>
    %96 = vector.shape_cast %95 : vector<16x8xf32> to vector<1x16x8xf32>
    %cst_37 = arith.constant dense<0.000000e+00> : vector<1xf32>
    %97 = vector.multi_reduction <add>, %96, %cst_37 [1, 2] : vector<1x16x8xf32> to vector<1xf32>
    %98 = vector.shape_cast %97 : vector<1xf32> to vector<1x1x1xf32>
    %99 = vector.extract %98[0, 0, 0] : f32 from vector<1x1x1xf32>
    %100 = arith.mulf %21, %25 : vector<16x8xf32>
    %101 = arith.mulf %100, %11 : vector<16x8xf32>
    %102 = vector.shape_cast %101 : vector<16x8xf32> to vector<1x16x8xf32>
    %cst_38 = arith.constant dense<0.000000e+00> : vector<1xf32>
    %103 = vector.multi_reduction <add>, %102, %cst_38 [1, 2] : vector<1x16x8xf32> to vector<1xf32>
    %104 = vector.shape_cast %103 : vector<1xf32> to vector<1x1x1xf32>
    %105 = vector.extract %104[0, 0, 0] : f32 from vector<1x1x1xf32>
    %106 = arith.mulf %100, %100 : vector<16x8xf32>
    %107 = vector.shape_cast %106 : vector<16x8xf32> to vector<1x16x8xf32>
    %cst_39 = arith.constant dense<0.000000e+00> : vector<1xf32>
    %108 = vector.multi_reduction <add>, %107, %cst_39 [1, 2] : vector<1x16x8xf32> to vector<1xf32>
    %109 = vector.shape_cast %108 : vector<1xf32> to vector<1x1x1xf32>
    %110 = vector.extract %109[0, 0, 0] : f32 from vector<1x1x1xf32>
    %111 = arith.mulf %11, %11 : vector<16x8xf32>
    %112 = vector.shape_cast %111 : vector<16x8xf32> to vector<1x16x8xf32>
    %cst_40 = arith.constant dense<0.000000e+00> : vector<1xf32>
    %113 = vector.multi_reduction <add>, %112, %cst_40 [1, 2] : vector<1x16x8xf32> to vector<1xf32>
    %114 = vector.shape_cast %113 : vector<1xf32> to vector<1x1x1xf32>
    %115 = vector.extract %114[0, 0, 0] : f32 from vector<1x1x1xf32>
    %116 = arith.addf %110, %115 : f32
    %117 = vector.shape_cast %100 : vector<16x8xf32> to vector<1x16x8xf32>
    %cst_41 = arith.constant dense<0.000000e+00> : vector<1xf32>
    %118 = vector.multi_reduction <add>, %117, %cst_41 [1, 2] : vector<1x16x8xf32> to vector<1xf32>
    %119 = vector.shape_cast %118 : vector<1xf32> to vector<1x1x1xf32>
    %120 = vector.extract %119[0, 0, 0] : f32 from vector<1x1x1xf32>
    %c2_i32 = arith.constant 2 : i32
    %121 = vector.broadcast %c2_i32 : i32 to vector<16x8xi32>
    %122 = arith.cmpi eq, %13, %121 : vector<16x8xi32>
    %123 = arith.subf %27, %5 : vector<16x8xf32>
    %cst_42 = arith.constant 0.000000e+00 : f32
    %124 = vector.broadcast %cst_42 : f32 to vector<16x8xf32>
    %125 = arith.select %122, %123, %124 : vector<16x8xi1>, vector<16x8xf32>
    %126 = vector.shape_cast %125 : vector<16x8xf32> to vector<1x16x8xf32>
    %cst_43 = arith.constant dense<0.000000e+00> : vector<1xf32>
    %127 = vector.multi_reduction <add>, %126, %cst_43 [1, 2] : vector<1x16x8xf32> to vector<1xf32>
    %128 = vector.shape_cast %127 : vector<1xf32> to vector<1x1x1xf32>
    %129 = vector.extract %128[0, 0, 0] : f32 from vector<1x1x1xf32>
    %130 = arith.extui %122 : vector<16x8xi1> to vector<16x8xi32>
    %131 = arith.sitofp %130 : vector<16x8xi32> to vector<16x8xf32>
    %132 = vector.shape_cast %131 : vector<16x8xf32> to vector<1x16x8xf32>
    %cst_44 = arith.constant dense<0.000000e+00> : vector<1xf32>
    %133 = vector.multi_reduction <add>, %132, %cst_44 [1, 2] : vector<1x16x8xf32> to vector<1xf32>
    %134 = vector.shape_cast %133 : vector<1xf32> to vector<1x1x1xf32>
    %135 = vector.extract %134[0, 0, 0] : f32 from vector<1x1x1xf32>
    %136 = arith.addf %7, %9 : vector<16x8xf32>
    %137 = arith.addf %136, %11 : vector<16x8xf32>
    %cst_45 = arith.constant 1.000000e+00 : f32
    %138 = vector.broadcast %cst_45 : f32 to vector<16x8xf32>
    %139 = arith.subf %138, %137 : vector<16x8xf32>
    %cst_46 = arith.constant 0.000000e+00 : f32
    %140 = vector.broadcast %cst_46 : f32 to vector<16x1xf32>
    %141 = vector.extract_strided_slice %139 {offsets = [0, 1], sizes = [16, 7], strides = [1, 1]} : vector<16x8xf32> to vector<16x7xf32>
    %142 = tpu.concatenate %141, %140 in 1 : vector<16x7xf32>, vector<16x1xf32> -> vector<16x8xf32>
    %143 = vector.extract_strided_slice %139 {offsets = [0, 0], sizes = [16, 7], strides = [1, 1]} : vector<16x8xf32> to vector<16x7xf32>
    %144 = tpu.concatenate %140, %143 in 1 : vector<16x1xf32>, vector<16x7xf32> -> vector<16x8xf32>
    %145 = arith.addf %139, %142 : vector<16x8xf32>
    %146 = arith.addf %145, %144 : vector<16x8xf32>
    %cst_47 = arith.constant 0.000000e+00 : f32
    %147 = vector.broadcast %cst_47 : f32 to vector<1x8xf32>
    %148 = vector.extract_strided_slice %146 {offsets = [1, 0], sizes = [15, 8], strides = [1, 1]} : vector<16x8xf32> to vector<15x8xf32>
    %149 = tpu.concatenate %148, %147 in 0 : vector<15x8xf32>, vector<1x8xf32> -> vector<16x8xf32>
    %150 = vector.extract_strided_slice %146 {offsets = [0, 0], sizes = [15, 8], strides = [1, 1]} : vector<16x8xf32> to vector<15x8xf32>
    %151 = tpu.concatenate %147, %150 in 0 : vector<1x8xf32>, vector<15x8xf32> -> vector<16x8xf32>
    %152 = tpu.iota {dimensions = array<i32: 0>} : vector<16x1xi32>
    %c8_i32 = arith.constant 8 : i32
    %c0_i32_48 = arith.constant 0 : i32
    %153 = arith.cmpi eq, %c8_i32, %c0_i32_48 : i32
    %c1_i32_49 = arith.constant 1 : i32
    %154 = arith.select %153, %c1_i32_49, %c8_i32 : i32
    %155 = vector.broadcast %154 : i32 to vector<16x1xi32>
    %156 = arith.remsi %152, %155 : vector<16x1xi32>
    %c0_i32_50 = arith.constant 0 : i32
    %157 = vector.broadcast %c0_i32_50 : i32 to vector<16x1xi32>
    %158 = arith.cmpi ne, %156, %157 : vector<16x1xi32>
    %c0_i32_51 = arith.constant 0 : i32
    %159 = vector.broadcast %c0_i32_51 : i32 to vector<16x1xi32>
    %160 = arith.cmpi slt, %156, %159 : vector<16x1xi32>
    %c0_i32_52 = arith.constant 0 : i32
    %161 = arith.cmpi slt, %154, %c0_i32_52 : i32
    %162 = vector.broadcast %161 : i1 to vector<16x1xi1>
    %163 = vector.broadcast %162 : vector<16x1xi1> to vector<16x1xi1>
    %164 = arith.xori %160, %163 : vector<16x1xi1>
    %165 = arith.andi %164, %158 : vector<16x1xi1>
    %166 = vector.broadcast %154 : i32 to vector<16x1xi32>
    %167 = arith.addi %156, %166 : vector<16x1xi32>
    %168 = arith.select %165, %167, %156 : vector<16x1xi1>, vector<16x1xi32>
    %c7_i32 = arith.constant 7 : i32
    %169 = vector.broadcast %c7_i32 : i32 to vector<16x1xi32>
    %170 = arith.cmpi slt, %168, %169 : vector<16x1xi32>
    %cst_53 = arith.constant 0.000000e+00 : f32
    %171 = vector.shape_cast %170 : vector<16x1xi1> to vector<16x1xi1>
    %172 = vector.broadcast %171 : vector<16x1xi1> to vector<16x8xi1>
    %173 = vector.broadcast %cst_53 : f32 to vector<16x8xf32>
    %174 = arith.select %172, %149, %173 : vector<16x8xi1>, vector<16x8xf32>
    %c1_i32_54 = arith.constant 1 : i32
    %175 = vector.broadcast %c1_i32_54 : i32 to vector<16x1xi32>
    %176 = arith.cmpi sge, %168, %175 : vector<16x1xi32>
    %cst_55 = arith.constant 0.000000e+00 : f32
    %177 = vector.shape_cast %176 : vector<16x1xi1> to vector<16x1xi1>
    %178 = vector.broadcast %177 : vector<16x1xi1> to vector<16x8xi1>
    %179 = vector.broadcast %cst_55 : f32 to vector<16x8xf32>
    %180 = arith.select %178, %151, %179 : vector<16x8xi1>, vector<16x8xf32>
    %181 = arith.addf %146, %174 : vector<16x8xf32>
    %182 = arith.addf %181, %180 : vector<16x8xf32>
    %c0_i32_56 = arith.constant 0 : i32
    %183 = arith.cmpi sgt, %arg1, %c0_i32_56 : i32
    %184 = arith.extui %183 : i1 to i32
    %185 = arith.sitofp %184 : i32 to f32
    %c0_57 = arith.constant 0 : index
    %c0_58 = arith.constant 0 : index
    %c0_59 = arith.constant 0 : index
    %c0_60 = arith.constant 0 : index
    %186 = vector.load %arg5[%c0_57, %c0_58, %c0_59, %c0_60] : memref<1x3x8x8xf32, #tpu.memory_space<vmem>>, vector<1x1x8x8xf32>
    %187 = vector.shape_cast %186 : vector<1x1x8x8xf32> to vector<8x8xf32>
    %c0_61 = arith.constant 0 : index
    %c1_62 = arith.constant 1 : index
    %c0_63 = arith.constant 0 : index
    %c0_64 = arith.constant 0 : index
    %188 = vector.load %arg5[%c0_61, %c1_62, %c0_63, %c0_64] : memref<1x3x8x8xf32, #tpu.memory_space<vmem>>, vector<1x1x8x8xf32>
    %189 = vector.shape_cast %188 : vector<1x1x8x8xf32> to vector<8x8xf32>
    %190 = arith.addf %187, %189 : vector<8x8xf32>
    %c0_65 = arith.constant 0 : index
    %c2_66 = arith.constant 2 : index
    %c0_67 = arith.constant 0 : index
    %c0_68 = arith.constant 0 : index
    %191 = vector.load %arg5[%c0_65, %c2_66, %c0_67, %c0_68] : memref<1x3x8x8xf32, #tpu.memory_space<vmem>>, vector<1x1x8x8xf32>
    %192 = vector.shape_cast %191 : vector<1x1x8x8xf32> to vector<8x8xf32>
    %193 = arith.addf %190, %192 : vector<8x8xf32>
    %cst_69 = arith.constant 1.000000e+00 : f32
    %194 = vector.broadcast %cst_69 : f32 to vector<8x8xf32>
    %195 = arith.subf %194, %193 : vector<8x8xf32>
    %cst_70 = arith.constant 0.000000e+00 : f32
    %196 = vector.broadcast %cst_70 : f32 to vector<8x1xf32>
    %197 = vector.extract_strided_slice %195 {offsets = [0, 1], sizes = [8, 7], strides = [1, 1]} : vector<8x8xf32> to vector<8x7xf32>
    %198 = tpu.concatenate %197, %196 in 1 : vector<8x7xf32>, vector<8x1xf32> -> vector<8x8xf32>
    %199 = vector.extract_strided_slice %195 {offsets = [0, 0], sizes = [8, 7], strides = [1, 1]} : vector<8x8xf32> to vector<8x7xf32>
    %200 = tpu.concatenate %196, %199 in 1 : vector<8x1xf32>, vector<8x7xf32> -> vector<8x8xf32>
    %201 = arith.addf %195, %198 : vector<8x8xf32>
    %202 = arith.addf %201, %200 : vector<8x8xf32>
    %cst_71 = arith.constant 0.000000e+00 : f32
    %203 = vector.broadcast %cst_71 : f32 to vector<1x8xf32>
    %204 = vector.extract_strided_slice %202 {offsets = [1, 0], sizes = [7, 8], strides = [1, 1]} : vector<8x8xf32> to vector<7x8xf32>
    %205 = tpu.concatenate %204, %203 in 0 : vector<7x8xf32>, vector<1x8xf32> -> vector<8x8xf32>
    %206 = vector.extract_strided_slice %202 {offsets = [0, 0], sizes = [7, 8], strides = [1, 1]} : vector<8x8xf32> to vector<7x8xf32>
    %207 = tpu.concatenate %203, %206 in 0 : vector<1x8xf32>, vector<7x8xf32> -> vector<8x8xf32>
    %208 = tpu.iota {dimensions = array<i32: 0>} : vector<8x1xi32>
    %c8_i32_72 = arith.constant 8 : i32
    %c0_i32_73 = arith.constant 0 : i32
    %209 = arith.cmpi eq, %c8_i32_72, %c0_i32_73 : i32
    %c1_i32_74 = arith.constant 1 : i32
    %210 = arith.select %209, %c1_i32_74, %c8_i32_72 : i32
    %211 = vector.broadcast %210 : i32 to vector<8x1xi32>
    %212 = arith.remsi %208, %211 : vector<8x1xi32>
    %c0_i32_75 = arith.constant 0 : i32
    %213 = vector.broadcast %c0_i32_75 : i32 to vector<8x1xi32>
    %214 = arith.cmpi ne, %212, %213 : vector<8x1xi32>
    %c0_i32_76 = arith.constant 0 : i32
    %215 = vector.broadcast %c0_i32_76 : i32 to vector<8x1xi32>
    %216 = arith.cmpi slt, %212, %215 : vector<8x1xi32>
    %c0_i32_77 = arith.constant 0 : i32
    %217 = arith.cmpi slt, %210, %c0_i32_77 : i32
    %218 = vector.broadcast %217 : i1 to vector<8x1xi1>
    %219 = vector.broadcast %218 : vector<8x1xi1> to vector<8x1xi1>
    %220 = arith.xori %216, %219 : vector<8x1xi1>
    %221 = arith.andi %220, %214 : vector<8x1xi1>
    %222 = vector.broadcast %210 : i32 to vector<8x1xi32>
    %223 = arith.addi %212, %222 : vector<8x1xi32>
    %224 = arith.select %221, %223, %212 : vector<8x1xi1>, vector<8x1xi32>
    %c7_i32_78 = arith.constant 7 : i32
    %225 = vector.broadcast %c7_i32_78 : i32 to vector<8x1xi32>
    %226 = arith.cmpi slt, %224, %225 : vector<8x1xi32>
    %cst_79 = arith.constant 0.000000e+00 : f32
    %227 = vector.shape_cast %226 : vector<8x1xi1> to vector<8x1xi1>
    %228 = vector.broadcast %227 : vector<8x1xi1> to vector<8x8xi1>
    %229 = vector.broadcast %cst_79 : f32 to vector<8x8xf32>
    %230 = arith.select %228, %205, %229 : vector<8x8xi1>, vector<8x8xf32>
    %c1_i32_80 = arith.constant 1 : i32
    %231 = vector.broadcast %c1_i32_80 : i32 to vector<8x1xi32>
    %232 = arith.cmpi sge, %224, %231 : vector<8x1xi32>
    %cst_81 = arith.constant 0.000000e+00 : f32
    %233 = vector.shape_cast %232 : vector<8x1xi1> to vector<8x1xi1>
    %234 = vector.broadcast %233 : vector<8x1xi1> to vector<8x8xi1>
    %235 = vector.broadcast %cst_81 : f32 to vector<8x8xf32>
    %236 = arith.select %234, %207, %235 : vector<8x8xi1>, vector<8x8xf32>
    %237 = arith.addf %202, %230 : vector<8x8xf32>
    %238 = arith.addf %237, %236 : vector<8x8xf32>
    %239 = vector.broadcast %185 : f32 to vector<8x8xf32>
    %240 = arith.mulf %238, %239 : vector<8x8xf32>
    %c3_i32 = arith.constant 3 : i32
    %241 = arith.cmpi slt, %arg1, %c3_i32 : i32
    %242 = arith.extui %241 : i1 to i32
    %243 = arith.sitofp %242 : i32 to f32
    %c0_82 = arith.constant 0 : index
    %c0_83 = arith.constant 0 : index
    %c0_84 = arith.constant 0 : index
    %c0_85 = arith.constant 0 : index
    %244 = vector.load %arg6[%c0_82, %c0_83, %c0_84, %c0_85] : memref<1x3x8x8xf32, #tpu.memory_space<vmem>>, vector<1x1x8x8xf32>
    %245 = vector.shape_cast %244 : vector<1x1x8x8xf32> to vector<8x8xf32>
    %c0_86 = arith.constant 0 : index
    %c1_87 = arith.constant 1 : index
    %c0_88 = arith.constant 0 : index
    %c0_89 = arith.constant 0 : index
    %246 = vector.load %arg6[%c0_86, %c1_87, %c0_88, %c0_89] : memref<1x3x8x8xf32, #tpu.memory_space<vmem>>, vector<1x1x8x8xf32>
    %247 = vector.shape_cast %246 : vector<1x1x8x8xf32> to vector<8x8xf32>
    %248 = arith.addf %245, %247 : vector<8x8xf32>
    %c0_90 = arith.constant 0 : index
    %c2_91 = arith.constant 2 : index
    %c0_92 = arith.constant 0 : index
    %c0_93 = arith.constant 0 : index
    %249 = vector.load %arg6[%c0_90, %c2_91, %c0_92, %c0_93] : memref<1x3x8x8xf32, #tpu.memory_space<vmem>>, vector<1x1x8x8xf32>
    %250 = vector.shape_cast %249 : vector<1x1x8x8xf32> to vector<8x8xf32>
    %251 = arith.addf %248, %250 : vector<8x8xf32>
    %cst_94 = arith.constant 1.000000e+00 : f32
    %252 = vector.broadcast %cst_94 : f32 to vector<8x8xf32>
    %253 = arith.subf %252, %251 : vector<8x8xf32>
    %cst_95 = arith.constant 0.000000e+00 : f32
    %254 = vector.broadcast %cst_95 : f32 to vector<8x1xf32>
    %255 = vector.extract_strided_slice %253 {offsets = [0, 1], sizes = [8, 7], strides = [1, 1]} : vector<8x8xf32> to vector<8x7xf32>
    %256 = tpu.concatenate %255, %254 in 1 : vector<8x7xf32>, vector<8x1xf32> -> vector<8x8xf32>
    %257 = vector.extract_strided_slice %253 {offsets = [0, 0], sizes = [8, 7], strides = [1, 1]} : vector<8x8xf32> to vector<8x7xf32>
    %258 = tpu.concatenate %254, %257 in 1 : vector<8x1xf32>, vector<8x7xf32> -> vector<8x8xf32>
    %259 = arith.addf %253, %256 : vector<8x8xf32>
    %260 = arith.addf %259, %258 : vector<8x8xf32>
    %cst_96 = arith.constant 0.000000e+00 : f32
    %261 = vector.broadcast %cst_96 : f32 to vector<1x8xf32>
    %262 = vector.extract_strided_slice %260 {offsets = [1, 0], sizes = [7, 8], strides = [1, 1]} : vector<8x8xf32> to vector<7x8xf32>
    %263 = tpu.concatenate %262, %261 in 0 : vector<7x8xf32>, vector<1x8xf32> -> vector<8x8xf32>
    %264 = vector.extract_strided_slice %260 {offsets = [0, 0], sizes = [7, 8], strides = [1, 1]} : vector<8x8xf32> to vector<7x8xf32>
    %265 = tpu.concatenate %261, %264 in 0 : vector<1x8xf32>, vector<7x8xf32> -> vector<8x8xf32>
    %266 = tpu.iota {dimensions = array<i32: 0>} : vector<8x1xi32>
    %c8_i32_97 = arith.constant 8 : i32
    %c0_i32_98 = arith.constant 0 : i32
    %267 = arith.cmpi eq, %c8_i32_97, %c0_i32_98 : i32
    %c1_i32_99 = arith.constant 1 : i32
    %268 = arith.select %267, %c1_i32_99, %c8_i32_97 : i32
    %269 = vector.broadcast %268 : i32 to vector<8x1xi32>
    %270 = arith.remsi %266, %269 : vector<8x1xi32>
    %c0_i32_100 = arith.constant 0 : i32
    %271 = vector.broadcast %c0_i32_100 : i32 to vector<8x1xi32>
    %272 = arith.cmpi ne, %270, %271 : vector<8x1xi32>
    %c0_i32_101 = arith.constant 0 : i32
    %273 = vector.broadcast %c0_i32_101 : i32 to vector<8x1xi32>
    %274 = arith.cmpi slt, %270, %273 : vector<8x1xi32>
    %c0_i32_102 = arith.constant 0 : i32
    %275 = arith.cmpi slt, %268, %c0_i32_102 : i32
    %276 = vector.broadcast %275 : i1 to vector<8x1xi1>
    %277 = vector.broadcast %276 : vector<8x1xi1> to vector<8x1xi1>
    %278 = arith.xori %274, %277 : vector<8x1xi1>
    %279 = arith.andi %278, %272 : vector<8x1xi1>
    %280 = vector.broadcast %268 : i32 to vector<8x1xi32>
    %281 = arith.addi %270, %280 : vector<8x1xi32>
    %282 = arith.select %279, %281, %270 : vector<8x1xi1>, vector<8x1xi32>
    %c7_i32_103 = arith.constant 7 : i32
    %283 = vector.broadcast %c7_i32_103 : i32 to vector<8x1xi32>
    %284 = arith.cmpi slt, %282, %283 : vector<8x1xi32>
    %cst_104 = arith.constant 0.000000e+00 : f32
    %285 = vector.shape_cast %284 : vector<8x1xi1> to vector<8x1xi1>
    %286 = vector.broadcast %285 : vector<8x1xi1> to vector<8x8xi1>
    %287 = vector.broadcast %cst_104 : f32 to vector<8x8xf32>
    %288 = arith.select %286, %263, %287 : vector<8x8xi1>, vector<8x8xf32>
    %c1_i32_105 = arith.constant 1 : i32
    %289 = vector.broadcast %c1_i32_105 : i32 to vector<8x1xi32>
    %290 = arith.cmpi sge, %282, %289 : vector<8x1xi32>
    %cst_106 = arith.constant 0.000000e+00 : f32
    %291 = vector.shape_cast %290 : vector<8x1xi1> to vector<8x1xi1>
    %292 = vector.broadcast %291 : vector<8x1xi1> to vector<8x8xi1>
    %293 = vector.broadcast %cst_106 : f32 to vector<8x8xf32>
    %294 = arith.select %292, %265, %293 : vector<8x8xi1>, vector<8x8xf32>
    %295 = arith.addf %260, %288 : vector<8x8xf32>
    %296 = arith.addf %295, %294 : vector<8x8xf32>
    %297 = vector.broadcast %243 : f32 to vector<8x8xf32>
    %298 = arith.mulf %296, %297 : vector<8x8xf32>
    %299 = tpu.concatenate %240, %182, %298 in 0 : vector<8x8xf32>, vector<16x8xf32>, vector<8x8xf32> -> vector<32x8xf32>
    %300 = vector.extract_strided_slice %299 {offsets = [0, 0], sizes = [16, 8], strides = [1, 1]} : vector<32x8xf32> to vector<16x8xf32>
    %301 = vector.extract_strided_slice %299 {offsets = [8, 0], sizes = [16, 8], strides = [1, 1]} : vector<32x8xf32> to vector<16x8xf32>
    %302 = arith.addf %300, %301 : vector<16x8xf32>
    %303 = vector.extract_strided_slice %299 {offsets = [16, 0], sizes = [16, 8], strides = [1, 1]} : vector<32x8xf32> to vector<16x8xf32>
    %304 = arith.addf %302, %303 : vector<16x8xf32>
    %cst_107 = arith.constant 2.700000e+01 : f32
    %305 = vector.broadcast %cst_107 : f32 to vector<16x8xf32>
    %306 = arith.mulf %305, %139 : vector<16x8xf32>
    %307 = arith.subf %306, %304 : vector<16x8xf32>
    %308 = math.absf %307 : vector<16x8xf32>
    %309 = vector.shape_cast %308 : vector<16x8xf32> to vector<1x16x8xf32>
    %cst_108 = arith.constant dense<0.000000e+00> : vector<1xf32>
    %310 = vector.multi_reduction <add>, %309, %cst_108 [1, 2] : vector<1x16x8xf32> to vector<1xf32>
    %311 = vector.shape_cast %310 : vector<1xf32> to vector<1x1x1xf32>
    %312 = vector.extract %311[0, 0, 0] : f32 from vector<1x1x1xf32>
    %313 = tpu.iota {dimensions = array<i32: 0>} : vector<16x1xi32>
    %cst_109 = arith.constant 0.000000e+00 : f32
    %314 = vector.broadcast %cst_109 : f32 to vector<16x128xf32>
    %c0_i32_110 = arith.constant 0 : i32
    %315 = vector.broadcast %c0_i32_110 : i32 to vector<16x1xi32>
    %316 = arith.cmpi eq, %313, %315 : vector<16x1xi32>
    %317 = vector.shape_cast %316 : vector<16x1xi1> to vector<16x1xi1>
    %318 = vector.broadcast %317 : vector<16x1xi1> to vector<16x128xi1>
    %319 = vector.broadcast %33 : f32 to vector<16x128xf32>
    %320 = arith.select %318, %319, %314 : vector<16x128xi1>, vector<16x128xf32>
    %c1_i32_111 = arith.constant 1 : i32
    %321 = vector.broadcast %c1_i32_111 : i32 to vector<16x1xi32>
    %322 = arith.cmpi eq, %313, %321 : vector<16x1xi32>
    %323 = vector.shape_cast %322 : vector<16x1xi1> to vector<16x1xi1>
    %324 = vector.broadcast %323 : vector<16x1xi1> to vector<16x128xi1>
    %325 = vector.broadcast %69 : f32 to vector<16x128xf32>
    %326 = arith.select %324, %325, %320 : vector<16x128xi1>, vector<16x128xf32>
    %c2_i32_112 = arith.constant 2 : i32
    %327 = vector.broadcast %c2_i32_112 : i32 to vector<16x1xi32>
    %328 = arith.cmpi eq, %313, %327 : vector<16x1xi32>
    %329 = vector.shape_cast %328 : vector<16x1xi1> to vector<16x1xi1>
    %330 = vector.broadcast %329 : vector<16x1xi1> to vector<16x128xi1>
    %331 = vector.broadcast %105 : f32 to vector<16x128xf32>
    %332 = arith.select %330, %331, %326 : vector<16x128xi1>, vector<16x128xf32>
    %c3_i32_113 = arith.constant 3 : i32
    %333 = vector.broadcast %c3_i32_113 : i32 to vector<16x1xi32>
    %334 = arith.cmpi eq, %313, %333 : vector<16x1xi32>
    %335 = vector.shape_cast %334 : vector<16x1xi1> to vector<16x1xi1>
    %336 = vector.broadcast %335 : vector<16x1xi1> to vector<16x128xi1>
    %337 = vector.broadcast %44 : f32 to vector<16x128xf32>
    %338 = arith.select %336, %337, %332 : vector<16x128xi1>, vector<16x128xf32>
    %c4_i32 = arith.constant 4 : i32
    %339 = vector.broadcast %c4_i32 : i32 to vector<16x1xi32>
    %340 = arith.cmpi eq, %313, %339 : vector<16x1xi32>
    %341 = vector.shape_cast %340 : vector<16x1xi1> to vector<16x1xi1>
    %342 = vector.broadcast %341 : vector<16x1xi1> to vector<16x128xi1>
    %343 = vector.broadcast %80 : f32 to vector<16x128xf32>
    %344 = arith.select %342, %343, %338 : vector<16x128xi1>, vector<16x128xf32>
    %c5_i32 = arith.constant 5 : i32
    %345 = vector.broadcast %c5_i32 : i32 to vector<16x1xi32>
    %346 = arith.cmpi eq, %313, %345 : vector<16x1xi32>
    %347 = vector.shape_cast %346 : vector<16x1xi1> to vector<16x1xi1>
    %348 = vector.broadcast %347 : vector<16x1xi1> to vector<16x128xi1>
    %349 = vector.broadcast %116 : f32 to vector<16x128xf32>
    %350 = arith.select %348, %349, %344 : vector<16x128xi1>, vector<16x128xf32>
    %c6_i32 = arith.constant 6 : i32
    %351 = vector.broadcast %c6_i32 : i32 to vector<16x1xi32>
    %352 = arith.cmpi eq, %313, %351 : vector<16x1xi32>
    %353 = vector.shape_cast %352 : vector<16x1xi1> to vector<16x1xi1>
    %354 = vector.broadcast %353 : vector<16x1xi1> to vector<16x128xi1>
    %355 = vector.broadcast %48 : f32 to vector<16x128xf32>
    %356 = arith.select %354, %355, %350 : vector<16x128xi1>, vector<16x128xf32>
    %c7_i32_114 = arith.constant 7 : i32
    %357 = vector.broadcast %c7_i32_114 : i32 to vector<16x1xi32>
    %358 = arith.cmpi eq, %313, %357 : vector<16x1xi32>
    %359 = vector.shape_cast %358 : vector<16x1xi1> to vector<16x1xi1>
    %360 = vector.broadcast %359 : vector<16x1xi1> to vector<16x128xi1>
    %361 = vector.broadcast %84 : f32 to vector<16x128xf32>
    %362 = arith.select %360, %361, %356 : vector<16x128xi1>, vector<16x128xf32>
    %c8_i32_115 = arith.constant 8 : i32
    %363 = vector.broadcast %c8_i32_115 : i32 to vector<16x1xi32>
    %364 = arith.cmpi eq, %313, %363 : vector<16x1xi32>
    %365 = vector.shape_cast %364 : vector<16x1xi1> to vector<16x1xi1>
    %366 = vector.broadcast %365 : vector<16x1xi1> to vector<16x128xi1>
    %367 = vector.broadcast %120 : f32 to vector<16x128xf32>
    %368 = arith.select %366, %367, %362 : vector<16x128xi1>, vector<16x128xf32>
    %c9_i32 = arith.constant 9 : i32
    %369 = vector.broadcast %c9_i32 : i32 to vector<16x1xi32>
    %370 = arith.cmpi eq, %313, %369 : vector<16x1xi32>
    %371 = vector.shape_cast %370 : vector<16x1xi1> to vector<16x1xi1>
    %372 = vector.broadcast %371 : vector<16x1xi1> to vector<16x128xi1>
    %373 = vector.broadcast %57 : f32 to vector<16x128xf32>
    %374 = arith.select %372, %373, %368 : vector<16x128xi1>, vector<16x128xf32>
    %c10_i32 = arith.constant 10 : i32
    %375 = vector.broadcast %c10_i32 : i32 to vector<16x1xi32>
    %376 = arith.cmpi eq, %313, %375 : vector<16x1xi32>
    %377 = vector.shape_cast %376 : vector<16x1xi1> to vector<16x1xi1>
    %378 = vector.broadcast %377 : vector<16x1xi1> to vector<16x128xi1>
    %379 = vector.broadcast %93 : f32 to vector<16x128xf32>
    %380 = arith.select %378, %379, %374 : vector<16x128xi1>, vector<16x128xf32>
    %c11_i32 = arith.constant 11 : i32
    %381 = vector.broadcast %c11_i32 : i32 to vector<16x1xi32>
    %382 = arith.cmpi eq, %313, %381 : vector<16x1xi32>
    %383 = vector.shape_cast %382 : vector<16x1xi1> to vector<16x1xi1>
    %384 = vector.broadcast %383 : vector<16x1xi1> to vector<16x128xi1>
    %385 = vector.broadcast %129 : f32 to vector<16x128xf32>
    %386 = arith.select %384, %385, %380 : vector<16x128xi1>, vector<16x128xf32>
    %c12_i32 = arith.constant 12 : i32
    %387 = vector.broadcast %c12_i32 : i32 to vector<16x1xi32>
    %388 = arith.cmpi eq, %313, %387 : vector<16x1xi32>
    %389 = vector.shape_cast %388 : vector<16x1xi1> to vector<16x1xi1>
    %390 = vector.broadcast %389 : vector<16x1xi1> to vector<16x128xi1>
    %391 = vector.broadcast %63 : f32 to vector<16x128xf32>
    %392 = arith.select %390, %391, %386 : vector<16x128xi1>, vector<16x128xf32>
    %c13_i32 = arith.constant 13 : i32
    %393 = vector.broadcast %c13_i32 : i32 to vector<16x1xi32>
    %394 = arith.cmpi eq, %313, %393 : vector<16x1xi32>
    %395 = vector.shape_cast %394 : vector<16x1xi1> to vector<16x1xi1>
    %396 = vector.broadcast %395 : vector<16x1xi1> to vector<16x128xi1>
    %397 = vector.broadcast %99 : f32 to vector<16x128xf32>
    %398 = arith.select %396, %397, %392 : vector<16x128xi1>, vector<16x128xf32>
    %c14_i32 = arith.constant 14 : i32
    %399 = vector.broadcast %c14_i32 : i32 to vector<16x1xi32>
    %400 = arith.cmpi eq, %313, %399 : vector<16x1xi32>
    %401 = vector.shape_cast %400 : vector<16x1xi1> to vector<16x1xi1>
    %402 = vector.broadcast %401 : vector<16x1xi1> to vector<16x128xi1>
    %403 = vector.broadcast %135 : f32 to vector<16x128xf32>
    %404 = arith.select %402, %403, %398 : vector<16x128xi1>, vector<16x128xf32>
    %c15_i32 = arith.constant 15 : i32
    %405 = vector.broadcast %c15_i32 : i32 to vector<16x1xi32>
    %406 = arith.cmpi eq, %313, %405 : vector<16x1xi32>
    %407 = vector.shape_cast %406 : vector<16x1xi1> to vector<16x1xi1>
    %408 = vector.broadcast %407 : vector<16x1xi1> to vector<16x128xi1>
    %409 = vector.broadcast %312 : f32 to vector<16x128xf32>
    %410 = arith.select %408, %409, %404 : vector<16x128xi1>, vector<16x128xf32>
    %411 = vector.shape_cast %410 : vector<16x128xf32> to vector<1x1x16x128xf32>
    %c0_116 = arith.constant 0 : index
    %c0_117 = arith.constant 0 : index
    %c0_118 = arith.constant 0 : index
    %c0_119 = arith.constant 0 : index
    %412 = vector.load %arg7[%c0_116, %c0_117, %c0_118, %c0_119] : memref<1x1x16x128xf32, #tpu.memory_space<vmem>>, vector<1x1x16x128xf32>
    tpu.vector_store %arg7[%c0_116, %c0_117, %c0_118, %c0_119], %411 {strides = array<i32>} : memref<1x1x16x128xf32, #tpu.memory_space<vmem>>, vector<1x1x16x128xf32>,
    return
  }
  func.func @transform_0(%arg0: i32, %arg1: i32) -> (i32, i32, i32, i32) {
    %c0_i32 = arith.constant 0 : i32
    %c0_i32_0 = arith.constant 0 : i32
    %c0_i32_1 = arith.constant 0 : i32
    return %arg0, %c0_i32, %arg1, %c0_i32_0 : i32, i32, i32, i32
  }
  func.func @transform_1(%arg0: i32, %arg1: i32) -> (i32, i32, i32, i32) {
    %c0_i32 = arith.constant 0 : i32
    %c0_i32_0 = arith.constant 0 : i32
    %c0_i32_1 = arith.constant 0 : i32
    return %arg0, %c0_i32, %arg1, %c0_i32_0 : i32, i32, i32, i32
  }
  func.func @transform_2(%arg0: i32, %arg1: i32) -> (i32, i32, i32) {
    %c0_i32 = arith.constant 0 : i32
    %c0_i32_0 = arith.constant 0 : i32
    return %arg0, %arg1, %c0_i32 : i32, i32, i32
  }
  func.func @transform_3(%arg0: i32, %arg1: i32) -> (i32, i32, i32, i32) {
    %c2_i32 = arith.constant 2 : i32
    %0 = arith.muli %arg1, %c2_i32 : i32
    %c1_i32 = arith.constant 1 : i32
    %1 = arith.subi %0, %c1_i32 : i32
    %c0_i32 = arith.constant 0 : i32
    %2 = arith.maxsi %1, %c0_i32 : i32
    %c0_i32_0 = arith.constant 0 : i32
    %c0_i32_1 = arith.constant 0 : i32
    %c0_i32_2 = arith.constant 0 : i32
    return %arg0, %c0_i32_0, %2, %c0_i32_1 : i32, i32, i32, i32
  }
  func.func @transform_4(%arg0: i32, %arg1: i32) -> (i32, i32, i32, i32) {
    %c1_i32 = arith.constant 1 : i32
    %0 = arith.addi %arg1, %c1_i32 : i32
    %c2_i32 = arith.constant 2 : i32
    %1 = arith.muli %0, %c2_i32 : i32
    %c7_i32 = arith.constant 7 : i32
    %2 = arith.minsi %1, %c7_i32 : i32
    %c0_i32 = arith.constant 0 : i32
    %c0_i32_0 = arith.constant 0 : i32
    %c0_i32_1 = arith.constant 0 : i32
    return %arg0, %c0_i32, %2, %c0_i32_0 : i32, i32, i32, i32
  }
  func.func @transform_5(%arg0: i32, %arg1: i32) -> (i32, i32, i32, i32) {
    %c0_i32 = arith.constant 0 : i32
    %c0_i32_0 = arith.constant 0 : i32
    %c0_i32_1 = arith.constant 0 : i32
    return %arg0, %arg1, %c0_i32, %c0_i32_0 : i32, i32, i32, i32
  }
}

</mosaic_0001>

<llo_original>
// kernel: unified_segmentation_loss.1
$region0: #{unified_segmentation_loss.1}
  #allocation0 [shape = 'u32[]', space=smem, size = 0x4, offset = 0x4, fixed_abs, tag = 'smem constant byte address 0x4 - core index']
  #allocation1 [shape = 'u32[144,128]{1,0:T(1,128)}', space=vmem, size = 0x12000, scoped, tag = 'internal scratch']
  #allocation10 [shape = 's32[]', space=sflag, size = 0x4, offset = 0, fixed_abs, tag = 'sflag constant byte address 0x0 - dummy sync flag']
  #allocation12 [shape = 's32[]', space=sflag, size = 0x4, offset = 0, fixed_abs, tag = 'sflag constant byte address 0x0 - dummy sync flag']
  %s0 = inlined_call_operand.hbm [shape: f32[2,3,64,8], index: 0, kind: input, shape index: {}]
  %s1 = inlined_call_operand.hbm [shape: f32[2,3,64,8], index: 1, kind: input, shape index: {}, may-alias: {1,3,4}]
  %s2 = inlined_call_operand.hbm [shape: s32[2,64,8], index: 2, kind: input, shape index: {}]
  %s3 = inlined_call_operand.hbm [shape: f32[2,3,64,8], index: 3, kind: input, shape index: {}, may-alias: {1,3,4}]
  %s4 = inlined_call_operand.hbm [shape: f32[2,3,64,8], index: 4, kind: input, shape index: {}, may-alias: {1,3,4}]
  %s5 = inlined_call_operand.vmem [shape: f32[2,4,16,128], index: 5, kind: output, shape index: {}]
  %s6 = sld [smem:[#allocation0]]
  $region73: #{unified_segmentation_loss.1} parent=0
    _
  %s8 = ssub.s32 1, %s6
  %s9 = scalar_select 0, %s8, %s6
  $region1: #{unified_segmentation_loss.1} parent=0
    #allocation2 [shape = 'u8[49152]{0}', space=vmem, size = 0xc000, scoped, tag = 'input window, operand 0']
    #allocation3 [shape = 's32[2]{0}', space=sflag, size = 0x8, scoped, tag = 'scoped memory for unified_segmentation_loss.1']
    #allocation4 [shape = 'u8[49152]{0}', space=vmem, size = 0xc000, scoped, tag = 'input window, operand 1']
    #allocation5 [shape = 's32[2]{0}', space=sflag, size = 0x8, scoped, tag = 'scoped memory for unified_segmentation_loss.1']
    #allocation6 [shape = 'u8[16384]{0}', space=vmem, size = 0x4000, scoped, tag = 'input window, operand 2']
    #allocation7 [shape = 'u8[24576]{0}', space=vmem, size = 0x6000, scoped, tag = 'input window, operand 3']
    #allocation8 [shape = 's32[2]{0}', space=sflag, size = 0x8, scoped, tag = 'scoped memory for unified_segmentation_loss.1']
    #allocation9 [shape = 'u8[24576]{0}', space=vmem, size = 0x6000, scoped, tag = 'input window, operand 4']
    %10 = vsyncpa [#allocation3], 0
    %s11 = scalar_lea.sflag [#allocation3], 1
    %12 = vsyncpa %s11, 0
    %13 = vsyncpa [#allocation5], 0
    %s14 = scalar_lea.sflag [#allocation5], 1
    %15 = vsyncpa %s14, 0
    %16 = vsyncpa [#allocation8], 0
    %s17 = scalar_lea.sflag [#allocation8], 1
    %18 = vsyncpa %s17, 0
    loop: start=0, step=1, limit=10
    $region2: #{unified_segmentation_loss.1} parent=1 // loop_pre_header
      _
    $region3: #{unified_segmentation_loss.1} parent=1 // loop_header
      %s20 = sphi 0, %s24
      %p21 = scmp.ge.s32.totalorder %s20, 10
      %s27 = sphi 0, %s39
      %s28 = sphi 0, %s35
      %s29 = sphi 0, %s27
      %s30 = sphi 0, %s28
      %s31 = sphi 0, %s29
      %s32 = sphi 0, %s30
      %s44 = sphi 0, %s46
      %s47 = sphi 0, %s44
      %s48 = sphi 0, %s47
      %s64 = sphi 0, %s48
      %s72 = sphi 0, %s74
      %s75 = sphi 0, %s72
      %s76 = sphi 0, %s75
      %s92 = sphi 0, %s76
      %s100 = sphi 0, %s102
      %s103 = sphi 0, %s100
      %s104 = sphi 0, %s103
      %s120 = sphi 0, %s104
      %s136 = sphi 0, %s138
      %s139 = sphi 0, %s136
      %s140 = sphi 0, %s139
      %s156 = sphi 0, %s140
      %s172 = sphi 0, %s174
      %s175 = sphi 0, %s172
      %s176 = sphi 0, %s175
      %s192 = sphi 0, %s176
      %s200 = sphi 0, %s202
      %s203 = sphi 0, %s200
      %s204 = sphi 0, %s203
      %s220 = sphi 0, %s204
    $region4: #{unified_segmentation_loss.1} parent=1 // loop_header_branch
      %23 = sbr.rel (%p21) target = $region8
    $region5: #{unified_segmentation_loss.1} parent=1 // loop_body
      %s25 = ssub.s32 %s20, 1
      %s26 = ssub.s32 %s20, 2
      %s33 = sadd.s32 1, %s28
      %p34 = scmp.ge.s32.totalorder %s33, 4
      %s35 = scalar_select %p34, 0, %s33
      %s36 = sadd.s32 1, %s27
      %s37 = scalar_select %p34, %s36, %s27
      %p38 = scmp.ge.s32.totalorder %s37, 2
      %s39 = scalar_select %p38, 0, %s37
      %s40 = ssub.s32 %s27, %s39
      %s41 = ssub.s32 %s28, %s35
      %s42 = sor.u32 %s40, %s41
      %p43 = scmp.eq.s32.totalorder %s42, 0
      %s45 = sadd.s32 %s44, 1
      %s46 = scalar_select %p43, %s44, %s45
      %p49 = pneg %p43
      %p50 = scmp.eq.s32.totalorder %s20, 7
      %p51 = por %p49, %p50
      %p52 = scmp.ne.s32.totalorder %s44, %s47
      %p53 = scmp.eq.s32.totalorder %s20, 0
      %p54 = por %p52, %p53
      %p55 = scmp.ne.s32.totalorder %s44, %s47
      %p56 = scmp.eq.s32.totalorder %s25, 7
      %p57 = por %p55, %p56
      %p58 = scmp.ne.s32.totalorder %s47, %s48
      %p59 = scmp.eq.s32.totalorder %s25, 0
      %p60 = por %p58, %p59
      %p61 = scmp.ne.s32.totalorder %s47, %s48
      %p62 = scmp.eq.s32.totalorder %s26, 7
      %p63 = por %p61, %p62
      %p65 = scmp.ne.s32.totalorder %s48, %s64
      %p66 = scmp.eq.s32.totalorder %s26, 0
      %p67 = por %p65, %p66
      %s68 = ssub.s32 %s27, %s39
      %s69 = ssub.s32 %s28, %s35
      %s70 = sor.u32 %s68, %s69
      %p71 = scmp.eq.s32.totalorder %s70, 0
      %s73 = sadd.s32 %s72, 1
      %s74 = scalar_select %p71, %s72, %s73
      %p77 = pneg %p71
      %p78 = scmp.eq.s32.totalorder %s20, 7
      %p79 = por %p77, %p78
      %p80 = scmp.ne.s32.totalorder %s72, %s75
      %p81 = scmp.eq.s32.totalorder %s20, 0
      %p82 = por %p80, %p81
      %p83 = scmp.ne.s32.totalorder %s72, %s75
      %p84 = scmp.eq.s32.totalorder %s25, 7
      %p85 = por %p83, %p84
      %p86 = scmp.ne.s32.totalorder %s75, %s76
      %p87 = scmp.eq.s32.totalorder %s25, 0
      %p88 = por %p86, %p87
      %p89 = scmp.ne.s32.totalorder %s75, %s76
      %p90 = scmp.eq.s32.totalorder %s26, 7
      %p91 = por %p89, %p90
      %p93 = scmp.ne.s32.totalorder %s76, %s92
      %p94 = scmp.eq.s32.totalorder %s26, 0
      %p95 = por %p93, %p94
      %s96 = ssub.s32 %s27, %s39
      %s97 = ssub.s32 %s28, %s35
      %s98 = sor.u32 %s96, %s97
      %p99 = scmp.eq.s32.totalorder %s98, 0
      %s101 = sadd.s32 %s100, 1
      %s102 = scalar_select %p99, %s100, %s101
      %p105 = pneg %p99
      %p106 = scmp.eq.s32.totalorder %s20, 7
      %p107 = por %p105, %p106
      %p108 = scmp.ne.s32.totalorder %s100, %s103
      %p109 = scmp.eq.s32.totalorder %s20, 0
      %p110 = por %p108, %p109
      %p111 = scmp.ne.s32.totalorder %s100, %s103
      %p112 = scmp.eq.s32.totalorder %s25, 7
      %p113 = por %p111, %p112
      %p114 = scmp.ne.s32.totalorder %s103, %s104
      %p115 = scmp.eq.s32.totalorder %s25, 0
      %p116 = por %p114, %p115
      %p117 = scmp.ne.s32.totalorder %s103, %s104
      %p118 = scmp.eq.s32.totalorder %s26, 7
      %p119 = por %p117, %p118
      %p121 = scmp.ne.s32.totalorder %s104, %s120
      %p122 = scmp.eq.s32.totalorder %s26, 0
      %p123 = por %p121, %p122
      %s124 = smul.u32 %s28, 2
      %s125 = ssub.s32 %s124, 1
      %p126 = scmp.gt.s32.totalorder %s125, 0
      %s127 = scalar_select %p126, %s125, 0
      %s128 = smul.u32 %s35, 2
      %s129 = ssub.s32 %s128, 1
      %p130 = scmp.gt.s32.totalorder %s129, 0
      %s131 = scalar_select %p130, %s129, 0
      %s132 = ssub.s32 %s27, %s39
      %s133 = ssub.s32 %s127, %s131
      %s134 = sor.u32 %s132, %s133
      %p135 = scmp.eq.s32.totalorder %s134, 0
      %s137 = sadd.s32 %s136, 1
      %s138 = scalar_select %p135, %s136, %s137
      %p141 = pneg %p135
      %p142 = scmp.eq.s32.totalorder %s20, 7
      %p143 = por %p141, %p142
      %p144 = scmp.ne.s32.totalorder %s136, %s139
      %p145 = scmp.eq.s32.totalorder %s20, 0
      %p146 = por %p144, %p145
      %p147 = scmp.ne.s32.totalorder %s136, %s139
      %p148 = scmp.eq.s32.totalorder %s25, 7
      %p149 = por %p147, %p148
      %p150 = scmp.ne.s32.totalorder %s139, %s140
      %p151 = scmp.eq.s32.totalorder %s25, 0
      %p152 = por %p150, %p151
      %p153 = scmp.ne.s32.totalorder %s139, %s140
      %p154 = scmp.eq.s32.totalorder %s26, 7
      %p155 = por %p153, %p154
      %p157 = scmp.ne.s32.totalorder %s140, %s156
      %p158 = scmp.eq.s32.totalorder %s26, 0
      %p159 = por %p157, %p158
      %s160 = sadd.s32 %s28, 1
      %s161 = smul.u32 %s160, 2
      %p162 = scmp.lt.s32.totalorder %s161, 7
      %s163 = scalar_select %p162, %s161, 7
      %s164 = sadd.s32 %s35, 1
      %s165 = smul.u32 %s164, 2
      %p166 = scmp.lt.s32.totalorder %s165, 7
      %s167 = scalar_select %p166, %s165, 7
      %s168 = ssub.s32 %s27, %s39
      %s169 = ssub.s32 %s163, %s167
      %s170 = sor.u32 %s168, %s169
      %p171 = scmp.eq.s32.totalorder %s170, 0
      %s173 = sadd.s32 %s172, 1
      %s174 = scalar_select %p171, %s172, %s173
      %p177 = pneg %p171
      %p178 = scmp.eq.s32.totalorder %s20, 7
      %p179 = por %p177, %p178
      %p180 = scmp.ne.s32.totalorder %s172, %s175
      %p181 = scmp.eq.s32.totalorder %s20, 0
      %p182 = por %p180, %p181
      %p183 = scmp.ne.s32.totalorder %s172, %s175
      %p184 = scmp.eq.s32.totalorder %s25, 7
      %p185 = por %p183, %p184
      %p186 = scmp.ne.s32.totalorder %s175, %s176
      %p187 = scmp.eq.s32.totalorder %s25, 0
      %p188 = por %p186, %p187
      %p189 = scmp.ne.s32.totalorder %s175, %s176
      %p190 = scmp.eq.s32.totalorder %s26, 7
      %p191 = por %p189, %p190
      %p193 = scmp.ne.s32.totalorder %s176, %s192
      %p194 = scmp.eq.s32.totalorder %s26, 0
      %p195 = por %p193, %p194
      %s196 = ssub.s32 %s27, %s39
      %s197 = ssub.s32 %s28, %s35
      %s198 = sor.u32 %s196, %s197
      %p199 = scmp.eq.s32.totalorder %s198, 0
      %s201 = sadd.s32 %s200, 1
      %s202 = scalar_select %p199, %s200, %s201
      %p205 = pneg %p199
      %p206 = scmp.eq.s32.totalorder %s20, 7
      %p207 = por %p205, %p206
      %p208 = scmp.ne.s32.totalorder %s200, %s203
      %p209 = scmp.eq.s32.totalorder %s20, 0
      %p210 = por %p208, %p209
      %p211 = scmp.ne.s32.totalorder %s200, %s203
      %p212 = scmp.eq.s32.totalorder %s25, 7
      %p213 = por %p211, %p212
      %p214 = scmp.ne.s32.totalorder %s203, %s204
      %p215 = scmp.eq.s32.totalorder %s25, 0
      %p216 = por %p214, %p215
      %p217 = scmp.ne.s32.totalorder %s203, %s204
      %p218 = scmp.eq.s32.totalorder %s26, 7
      %p219 = por %p217, %p218
      %p221 = scmp.ne.s32.totalorder %s204, %s220
      %p222 = scmp.eq.s32.totalorder %s26, 0
      %p223 = por %p221, %p222
      %p224 = scmp.le.s32.totalorder 1, %s20
      %p225 = scmp.lt.s32.totalorder %s20, 9
      %p226 = pnand %p224, %p225
      %p227 = pneg %p226
      // Predicated region
      $region9: #{unified_segmentation_loss.1} parent=5 // pred_check
        _
      $region10: #{unified_segmentation_loss.1} parent=5 // pred_check_branch
        %229 = sbr.rel (%p226) target = $region12
      $region11: #{unified_segmentation_loss.1} parent=5 // pred_region
        %s230 = ssub.s32 %s20, 1
      $region12: #{unified_segmentation_loss.1} parent=5 // pred_fallthru
        _
      %p231 = scmp.lt.s32.totalorder %s20, 8
      // Predicated region
      $region13: #{unified_segmentation_loss.1} parent=5 // pred_check
        %p232 = pneg %p231
      $region14: #{unified_segmentation_loss.1} parent=5 // pred_check_branch
        %234 = sbr.rel (%p232) target = $region16
      $region15: #{unified_segmentation_loss.1} parent=5 // pred_region
        // Predicated region
        $region17: #{unified_segmentation_loss.1} parent=15 // pred_check
          %p235 = pneg %p54
        $region18: #{unified_segmentation_loss.1} parent=15 // pred_check_branch
          %237 = sbr.rel (%p235) target = $region20
        $region19: #{unified_segmentation_loss.1} parent=15 // pred_region
          #allocation11 [shape = 'u32[6]{0}', space=smem, size = 0x18, scoped, tag = 'DMA stride descriptor']
          %s238 = sand.u32 %s44, 1
          %s239 = scalar_lea.sflag [#allocation3], %s238
          %s240 = sand.u32 %s44, 1
          %s241 = smul.addr %s240, 48
          %s242 = scalar_lea.vmem [#allocation2], %s241
          %s243 = smul.u32 2, %s28
          %s245 = ssub.s32 768, 768
          %246 = vsyncadd %s239, %s245
          %s247 = smul.addr %s27, 24
          %s248 = sadd.s32 %s243, %s247
          %s249 = smul.addr %s248, 128
          %s250 = scalar_lea.hbm %s0, %s249
          %s252 = sshll.u32 1, 14
          %s253 = sxor.u32 4294967295, %s252
          %s255 = sld [smem:[#allocation0]]
          %s256 = sadd.s32 2, %s255
          %s258 = sshll.u32 7, 26
          %s259 = sxor.u32 4294967295, %s258
          %s260 = sand.u32 0, %s259
          %s261 = sshll.u32 %s256, 26
          %s262 = sor.u32 %s260, %s261
          %s263 = sshll.u32 %s242, 4
          %s264 = int_to_ptr.vmem [resolvable:$true] %s263
          %270 = sst [smem:[#allocation11]] 1024
          %s271 = scalar_lea.smem [#allocation11], 1
          %272 = sst [smem:[%s271]] 256
          %s273 = scalar_lea.smem [#allocation11], 2
          %274 = sst [smem:[%s273]] 2
          %s275 = scalar_lea.smem [#allocation11], 3
          %276 = sst [smem:[%s275]] 128
          %s277 = scalar_lea.smem [#allocation11], 4
          %278 = sst [smem:[%s277]] 128
          %s279 = scalar_lea.smem [#allocation11], 5
          %280 = sst [smem:[%s279]] 8
          %282 = dma.general %s250, 768, %s264, %s239, 131072, [#allocation11], %s262, 0
        $region20: #{unified_segmentation_loss.1} parent=15 // pred_fallthru
          _
        // Predicated region
        $region21: #{unified_segmentation_loss.1} parent=15 // pred_check
          %p283 = pneg %p82
        $region22: #{unified_segmentation_loss.1} parent=15 // pred_check_branch
          %285 = sbr.rel (%p283) target = $region24
        $region23: #{unified_segmentation_loss.1} parent=15 // pred_region
          #allocation13 [shape = 'u32[6]{0}', space=smem, size = 0x18, scoped, tag = 'DMA stride descriptor']
          %s286 = sand.u32 %s20, 1
          %s287 = scalar_lea.sflag [#allocation5], %s286
          %s288 = sand.u32 %s72, 1
          %s289 = smul.addr %s288, 48
          %s290 = scalar_lea.vmem [#allocation4], %s289
          %s291 = smul.u32 2, %s28
          %s293 = ssub.s32 768, 768
          %294 = vsyncadd %s287, %s293
          %s295 = smul.addr %s27, 24
          %s296 = sadd.s32 %s291, %s295
          %s297 = smul.addr %s296, 128
          %s298 = scalar_lea.hbm %s1, %s297
          %s300 = sshll.u32 1, 14
          %s301 = sxor.u32 4294967295, %s300
          %s303 = sld [smem:[#allocation0]]
          %s304 = sadd.s32 2, %s303
          %s306 = sshll.u32 7, 26
          %s307 = sxor.u32 4294967295, %s306
          %s308 = sand.u32 0, %s307
          %s309 = sshll.u32 %s304, 26
          %s310 = sor.u32 %s308, %s309
          %s311 = sshll.u32 %s290, 4
          %s312 = int_to_ptr.vmem [resolvable:$true] %s311
          %318 = sst [smem:[#allocation13]] 1024
          %s319 = scalar_lea.smem [#allocation13], 1
          %320 = sst [smem:[%s319]] 256
          %s321 = scalar_lea.smem [#allocation13], 2
          %322 = sst [smem:[%s321]] 2
          %s323 = scalar_lea.smem [#allocation13], 3
          %324 = sst [smem:[%s323]] 128
          %s325 = scalar_lea.smem [#allocation13], 4
          %326 = sst [smem:[%s325]] 128
          %s327 = scalar_lea.smem [#allocation13], 5
          %328 = sst [smem:[%s327]] 8
          %330 = dma.general %s298, 768, %s312, %s287, 131072, [#allocation13], %s310, 0
        $region24: #{unified_segmentation_loss.1} parent=15 // pred_fallthru
          _
        // Predicated region
        $region25: #{unified_segmentation_loss.1} parent=15 // pred_check
          %p331 = pneg %p110
        $region26: #{unified_segmentation_loss.1} parent=15 // pred_check_branch
          %333 = sbr.rel (%p331) target = $region28
        $region27: #{unified_segmentation_loss.1} parent=15 // pred_region
          %s334 = sand.u32 %s20, 1
          %s335 = scalar_lea.sflag [#allocation5], %s334
          %s336 = sand.u32 %s100, 1
          %s337 = smul.addr %s336, 16
          %s338 = scalar_lea.vmem [#allocation6], %s337
          %s339 = smul.u32 2, %s28
          %s341 = ssub.s32 256, 256
          %342 = vsyncadd %s335, %s341
          %s343 = smul.addr %s27, 8
          %s344 = sadd.s32 %s339, %s343
          %s345 = smul.addr %s344, 128
          %s346 = scalar_lea.hbm %s2, %s345
          %s347 = sshll.u32 %s338, 4
          %s348 = int_to_ptr.vmem [resolvable:$true] %s347
          %353 = dma.hbm_to_vmem [thread:$0]  %s346, 256, %s348, %s335, 128, 128, 8
        $region28: #{unified_segmentation_loss.1} parent=15 // pred_fallthru
          _
        // Predicated region
        $region29: #{unified_segmentation_loss.1} parent=15 // pred_check
          %p354 = pneg %p146
        $region30: #{unified_segmentation_loss.1} parent=15 // pred_check_branch
          %356 = sbr.rel (%p354) target = $region32
        $region31: #{unified_segmentation_loss.1} parent=15 // pred_region
          %s357 = sand.u32 %s20, 1
          %s358 = scalar_lea.sflag [#allocation8], %s357
          %s359 = sand.u32 %s136, 1
          %s360 = smul.addr %s359, 24
          %s361 = scalar_lea.vmem [#allocation7], %s360
          %s362 = smul.u32 %s28, 2
          %s363 = ssub.s32 %s362, 1
          %p364 = scmp.gt.s32.totalorder %s363, 0
          %s365 = scalar_select %p364, %s363, 0
          %s367 = ssub.s32 384, 384
          %368 = vsyncadd %s358, %s367
          %s369 = smul.addr %s27, 24
          %s370 = sadd.s32 %s365, %s369
          %s371 = smul.addr %s370, 128
          %s372 = scalar_lea.hbm %s3, %s371
          %s373 = sshll.u32 %s361, 4
          %s374 = int_to_ptr.vmem [resolvable:$true] %s373
          %379 = dma.hbm_to_vmem [thread:$0]  %s372, 384, %s374, %s358, 1024, 128, 8
        $region32: #{unified_segmentation_loss.1} parent=15 // pred_fallthru
          _
        // Predicated region
        $region33: #{unified_segmentation_loss.1} parent=15 // pred_check
          %p380 = pneg %p182
        $region34: #{unified_segmentation_loss.1} parent=15 // pred_check_branch
          %382 = sbr.rel (%p380) target = $region36
        $region35: #{unified_segmentation_loss.1} parent=15 // pred_region
          %s383 = sand.u32 %s20, 1
          %s384 = scalar_lea.sflag [#allocation8], %s383
          %s385 = sand.u32 %s172, 1
          %s386 = smul.addr %s385, 24
          %s387 = scalar_lea.vmem [#allocation9], %s386
          %s388 = sadd.s32 %s28, 1
          %s389 = smul.u32 %s388, 2
          %p390 = scmp.lt.s32.totalorder %s389, 7
          %s391 = scalar_select %p390, %s389, 7
          %s393 = ssub.s32 384, 384
          %394 = vsyncadd %s384, %s393
          %s395 = smul.addr %s27, 24
          %s396 = sadd.s32 %s391, %s395
          %s397 = smul.addr %s396, 128
          %s398 = scalar_lea.hbm %s4, %s397
          %s399 = sshll.u32 %s387, 4
          %s400 = int_to_ptr.vmem [resolvable:$true] %s399
          %405 = dma.hbm_to_vmem [thread:$0]  %s398, 384, %s400, %s384, 1024, 128, 8
        $region36: #{unified_segmentation_loss.1} parent=15 // pred_fallthru
          _
      $region16: #{unified_segmentation_loss.1} parent=5 // pred_fallthru
        _
      %p406 = scmp.le.s32.totalorder 1, %s20
      %p407 = scmp.lt.s32.totalorder %s20, 9
      %p408 = pnand %p406, %p407
      %p409 = pneg %p408
      // Predicated region
      $region37: #{unified_segmentation_loss.1} parent=5 // pred_check
        _
      $region38: #{unified_segmentation_loss.1} parent=5 // pred_check_branch
        %411 = sbr.rel (%p408) target = $region40
      $region39: #{unified_segmentation_loss.1} parent=5 // pred_region
        %s412 = ssub.s32 %s20, 1
        %s413 = sand.u32 %s47, 1
        %s414 = scalar_lea.sflag [#allocation3], %s413
        %s415 = sand.u32 %s47, 1
        %s416 = smul.addr %s415, 48
        %s417 = scalar_lea.vmem [#allocation2], %s416
        // Predicated region
        $region41: #{unified_segmentation_loss.1} parent=39 // pred_check
          %p418 = pneg %p60
        $region42: #{unified_segmentation_loss.1} parent=39 // pred_check_branch
          %420 = sbr.rel (%p418) target = $region44
        $region43: #{unified_segmentation_loss.1} parent=39 // pred_region
          %421 = dma.done %s414, 768
        $region44: #{unified_segmentation_loss.1} parent=39 // pred_fallthru
          _
        %s422 = sand.u32 %s25, 1
        %s423 = scalar_lea.sflag [#allocation5], %s422
        %s424 = sand.u32 %s75, 1
        %s425 = smul.addr %s424, 48
        %s426 = scalar_lea.vmem [#allocation4], %s425
        // Predicated region
        $region45: #{unified_segmentation_loss.1} parent=39 // pred_check
          %p427 = pneg %p88
        $region46: #{unified_segmentation_loss.1} parent=39 // pred_check_branch
          %429 = sbr.rel (%p427) target = $region48
        $region47: #{unified_segmentation_loss.1} parent=39 // pred_region
          %430 = dma.done %s423, 768
        $region48: #{unified_segmentation_loss.1} parent=39 // pred_fallthru
          _
        %s431 = sand.u32 %s25, 1
        %s432 = scalar_lea.sflag [#allocation5], %s431
        %s433 = sand.u32 %s103, 1
        %s434 = smul.addr %s433, 16
        %s435 = scalar_lea.vmem [#allocation6], %s434
        // Predicated region
        $region49: #{unified_segmentation_loss.1} parent=39 // pred_check
          %p436 = pneg %p116
        $region50: #{unified_segmentation_loss.1} parent=39 // pred_check_branch
          %438 = sbr.rel (%p436) target = $region52
        $region51: #{unified_segmentation_loss.1} parent=39 // pred_region
          %439 = dma.done %s432, 256
        $region52: #{unified_segmentation_loss.1} parent=39 // pred_fallthru
          _
        %s440 = sand.u32 %s25, 1
        %s441 = scalar_lea.sflag [#allocation8], %s440
        %s442 = sand.u32 %s139, 1
        %s443 = smul.addr %s442, 24
        %s444 = scalar_lea.vmem [#allocation7], %s443
        // Predicated region
        $region53: #{unified_segmentation_loss.1} parent=39 // pred_check
          %p445 = pneg %p152
        $region54: #{unified_segmentation_loss.1} parent=39 // pred_check_branch
          %447 = sbr.rel (%p445) target = $region56
        $region55: #{unified_segmentation_loss.1} parent=39 // pred_region
          %448 = dma.done %s441, 384
        $region56: #{unified_segmentation_loss.1} parent=39 // pred_fallthru
          _
        %s449 = sand.u32 %s25, 1
        %s450 = scalar_lea.sflag [#allocation8], %s449
        %s451 = sand.u32 %s175, 1
        %s452 = smul.addr %s451, 24
        %s453 = scalar_lea.vmem [#allocation9], %s452
        // Predicated region
        $region57: #{unified_segmentation_loss.1} parent=39 // pred_check
          %p454 = pneg %p188
        $region58: #{unified_segmentation_loss.1} parent=39 // pred_check_branch
          %456 = sbr.rel (%p454) target = $region60
        $region59: #{unified_segmentation_loss.1} parent=39 // pred_region
          %457 = dma.done %s450, 384
        $region60: #{unified_segmentation_loss.1} parent=39 // pred_fallthru
          _
        %s458 = sand.u32 %s47, 1
        %s459 = scalar_lea.sflag [#allocation3], %s458
        %s460 = sand.u32 %s47, 1
        %s461 = smul.addr %s460, 48
        %s462 = scalar_lea.vmem [#allocation2], %s461
        %p463 = pneg %p60
        %p464 = pneg %p57
        %s465 = sand.u32 %s25, 1
        %s466 = scalar_lea.sflag [#allocation5], %s465
        %s467 = sand.u32 %s75, 1
        %s468 = smul.addr %s467, 48
        %s469 = scalar_lea.vmem [#allocation4], %s468
        %p470 = pneg %p88
        %p471 = pneg %p85
        %s472 = sand.u32 %s25, 1
        %s473 = scalar_lea.sflag [#allocation5], %s472
        %s474 = sand.u32 %s103, 1
        %s475 = smul.addr %s474, 16
        %s476 = scalar_lea.vmem [#allocation6], %s475
        %p477 = pneg %p116
        %p478 = pneg %p113
        %s479 = sand.u32 %s25, 1
        %s480 = scalar_lea.sflag [#allocation8], %s479
        %s481 = sand.u32 %s139, 1
        %s482 = smul.addr %s481, 24
        %s483 = scalar_lea.vmem [#allocation7], %s482
        %p484 = pneg %p152
        %p485 = pneg %p149
        %s486 = sand.u32 %s25, 1
        %s487 = scalar_lea.sflag [#allocation8], %s486
        %s488 = sand.u32 %s175, 1
        %s489 = smul.addr %s488, 24
        %s490 = scalar_lea.vmem [#allocation9], %s489
        %p491 = pneg %p188
        %p492 = pneg %p185
        %p493 = pneg %p216
        %p494 = pneg %p213
        %p495 = scmp.lt.s32.totalorder %s29, 1
        %s496 = scalar_select %p495, %s29, 1
        %p497 = scmp.lt.s32.totalorder %s30, 3
        %s498 = scalar_select %p497, %s30, 3
        %s499 = smul.addr %s498, 2
        %s500 = smul.addr %s496, 8
        %s501 = sadd.s32 %s499, %s500
        %s502 = smul.addr %s501, 8
        %s503 = scalar_lea.vmem %s5, %s502
        %s504 = smul.u32 2, %s30
        %s505 = smul.u32 2, %s30
        %s506 = smul.u32 2, %s30
        %s507 = smul.u32 %s30, 2
        %s508 = ssub.s32 %s507, 1
        %p509 = scmp.gt.s32.totalorder %s508, 0
        %s510 = scalar_select %p509, %s508, 0
        %s511 = sadd.s32 %s30, 1
        %s512 = smul.u32 %s511, 2
        %p513 = scmp.lt.s32.totalorder %s512, 7
        %s514 = scalar_select %p513, %s512, 7
        %p515 = scmp.lt.s32.totalorder %s29, 1
        %s516 = scalar_select %p515, %s29, 1
        %p517 = scmp.lt.s32.totalorder %s30, 3
        %s518 = scalar_select %p517, %s30, 3
        %s519 = smul.addr %s518, 2
        %s520 = smul.addr %s516, 8
        %s521 = sadd.s32 %s519, %s520
        %s522 = smul.addr %s521, 8
        %s523 = scalar_lea.vmem %s5, %s522
        %v524 = vld [vmem:[%s417] sm:$0xff]
        %v525 = vld [vmem:[%s417 + $0x8] sm:$0xff]
        %s526 = scalar_lea.vmem %s417, 16 [#allocation2]
        %v527 = vld [vmem:[%s526] sm:$0xff]
        %v528 = vld [vmem:[%s526 + $0x8] sm:$0xff]
        %s529 = scalar_lea.vmem %s417, 32 [#allocation2]
        %v530 = vld [vmem:[%s529] sm:$0xff]
        %v531 = vld [vmem:[%s529 + $0x8] sm:$0xff]
        %v532 = vld [vmem:[%s426] sm:$0xff]
        %v533 = vld [vmem:[%s426 + $0x8] sm:$0xff]
        %s534 = scalar_lea.vmem %s426, 16 [#allocation4]
        %v535 = vld [vmem:[%s534] sm:$0xff]
        %v536 = vld [vmem:[%s534 + $0x8] sm:$0xff]
        %s537 = scalar_lea.vmem %s426, 32 [#allocation4]
        %v538 = vld [vmem:[%s537] sm:$0xff]
        %v539 = vld [vmem:[%s537 + $0x8] sm:$0xff]
        %v540 = vld [vmem:[%s435] sm:$0xff]
        %v541 = vld [vmem:[%s435 + $0x8] sm:$0xff]
        %v542 = vmax.f32 %v524, %v527
        %v543 = vmax.f32 %v525, %v528
        %v544 = vmax.f32 %v542, %v530
        %v545 = vmax.f32 %v543, %v531
        %v546 = vsub.f32 %v524, %v544
        %v547 = vsub.f32 %v525, %v545
        %v548 = vmul.f32 %v546, 1.442695
        %v549 = vpow.pop %v548
        %v550 = vmul.f32 %v547, 1.442695
        %v551 = vpow.pop %v550
        %v552 = vsub.f32 %v527, %v544
        %v553 = vsub.f32 %v528, %v545
        %v554 = vmul.f32 %v552, 1.442695
        %v555 = vpow.pop %v554
        %v556 = vmul.f32 %v553, 1.442695
        %v557 = vpow.pop %v556
        %v558 = vsub.f32 %v530, %v544
        %v559 = vsub.f32 %v531, %v545
        %v560 = vmul.f32 %v558, 1.442695
        %v561 = vpow.pop %v560
        %v562 = vmul.f32 %v559, 1.442695
        %v563 = vpow.pop %v562
        %v564 = vadd.f32 %v549, %v555
        %v565 = vadd.f32 %v551, %v557
        %v566 = vadd.f32 %v564, %v561
        %v567 = vadd.f32 %v565, %v563
        %v568 = vrcp.pop %v566
        %v569 = vmul.f32 1.0, %v568
        %v570 = vrcp.pop %v567
        %v571 = vmul.f32 1.0, %v570
        %v572 = vlog2.pop %v566
        %v573 = vmul.f32 %v572, 0.6931472
        %v574 = vlog2.pop %v567
        %v575 = vmul.f32 %v574, 0.6931472
        %v576 = vadd.f32 %v544, %v573
        %v577 = vadd.f32 %v545, %v575
        %v578 = vmul.f32 %v549, %v569
        %v579 = vmul.f32 %v551, %v571
        %v580 = vmul.f32 %v578, %v532
        %v581 = vmul.f32 %v579, %v533
        %vm582 = vcmask 64512
        %v583 = vsel %vm582, %v580, 0.0
        %v584 = vsel %vm582, %v581, 0.0
        %v585 = vadd.f32 %v583, %v584
        %586 = vadd.xlane.f32.xlu0 %v585
        %v587 = vpop.xlane.xlu0 %586
        %v588 = vrot.slane %v587, 4
        %v589 = vadd.f32 %v587, %v588
        %v590 = vrot.slane %v589, 2
        %v591 = vadd.f32 %v589, %v590
        %v592 = vrot.slane %v591, 1
        %v593 = vadd.f32 %v591, %v592
        %s594 = vtos %v593
        %v595 = vmul.f32 %v578, %v578
        %v596 = vmul.f32 %v579, %v579
        %v597 = vsel %vm582, %v595, 0.0
        %v598 = vsel %vm582, %v596, 0.0
        %v599 = vadd.f32 %v597, %v598
        %600 = vadd.xlane.f32.xlu0 %v599
        %v601 = vpop.xlane.xlu0 %600
        %v602 = vrot.slane %v601, 4
        %v603 = vadd.f32 %v601, %v602
        %v604 = vrot.slane %v603, 2
        %v605 = vadd.f32 %v603, %v604
        %v606 = vrot.slane %v605, 1
        %v607 = vadd.f32 %v605, %v606
        %s608 = vtos %v607
        %v609 = vmul.f32 %v532, %v532
        %v610 = vmul.f32 %v533, %v533
        %v611 = vsel %vm582, %v609, 0.0
        %v612 = vsel %vm582, %v610, 0.0
        %v613 = vadd.f32 %v611, %v612
        %614 = vadd.xlane.f32.xlu0 %v613
        %v615 = vpop.xlane.xlu0 %614
        %v616 = vrot.slane %v615, 4
        %v617 = vadd.f32 %v615, %v616
        %v618 = vrot.slane %v617, 2
        %v619 = vadd.f32 %v617, %v618
        %v620 = vrot.slane %v619, 1
        %v621 = vadd.f32 %v619, %v620
        %s622 = vtos %v621
        %s623 = sadd.f32 %s608, %s622
        %v624 = vsel %vm582, %v578, 0.0
        %v625 = vsel %vm582, %v579, 0.0
        %v626 = vadd.f32 %v624, %v625
        %627 = vadd.xlane.f32.xlu0 %v626
        %v628 = vpop.xlane.xlu0 %627
        %v629 = vrot.slane %v628, 4
        %v630 = vadd.f32 %v628, %v629
        %v631 = vrot.slane %v630, 2
        %v632 = vadd.f32 %v630, %v631
        %v633 = vrot.slane %v632, 1
        %v634 = vadd.f32 %v632, %v633
        %s635 = vtos %v634
        %vm636 = vcmp.eq.s32.totalorder %v540, 0
        %vm637 = vcmp.eq.s32.totalorder %v541, 0
        %v638 = vsub.f32 %v576, %v524
        %v639 = vsub.f32 %v577, %v525
        %v640 = vsel %vm636, %v638, 0.0
        %v641 = vsel %vm637, %v639, 0.0
        %v642 = vsel %vm582, %v640, 0.0
        %v643 = vsel %vm582, %v641, 0.0
        %v644 = vadd.f32 %v642, %v643
        %645 = vadd.xlane.f32.xlu0 %v644
        %v646 = vpop.xlane.xlu0 %645
        %v647 = vrot.slane %v646, 4
        %v648 = vadd.f32 %v646, %v647
        %v649 = vrot.slane %v648, 2
        %v650 = vadd.f32 %v648, %v649
        %v651 = vrot.slane %v650, 1
        %v652 = vadd.f32 %v650, %v651
        %s653 = vtos %v652
        %v654 = vsel %vm636, 1, 0
        %v655 = vsel %vm637, 1, 0
        %v656 = vcvt.s32.f32 %v654
        %v657 = vcvt.s32.f32 %v655
        %v658 = vsel %vm582, %v656, 0.0
        %v659 = vsel %vm582, %v657, 0.0
        %v660 = vadd.f32 %v658, %v659
        %661 = vadd.xlane.f32.xlu0 %v660
        %v662 = vpop.xlane.xlu0 %661
        %v663 = vrot.slane %v662, 4
        %v664 = vadd.f32 %v662, %v663
        %v665 = vrot.slane %v664, 2
        %v666 = vadd.f32 %v664, %v665
        %v667 = vrot.slane %v666, 1
        %v668 = vadd.f32 %v666, %v667
        %s669 = vtos %v668
        %v670 = vmul.f32 %v555, %v569
        %v671 = vmul.f32 %v557, %v571
        %v672 = vmul.f32 %v670, %v535
        %v673 = vmul.f32 %v671, %v536
        %v674 = vsel %vm582, %v672, 0.0
        %v675 = vsel %vm582, %v673, 0.0
        %v676 = vadd.f32 %v674, %v675
        %677 = vadd.xlane.f32.xlu0 %v676
        %v678 = vpop.xlane.xlu0 %677
        %v679 = vrot.slane %v678, 4
        %v680 = vadd.f32 %v678, %v679
        %v681 = vrot.slane %v680, 2
        %v682 = vadd.f32 %v680, %v681
        %v683 = vrot.slane %v682, 1
        %v684 = vadd.f32 %v682, %v683
        %s685 = vtos %v684
        %v686 = vmul.f32 %v670, %v670
        %v687 = vmul.f32 %v671, %v671
        %v688 = vsel %vm582, %v686, 0.0
        %v689 = vsel %vm582, %v687, 0.0
        %v690 = vadd.f32 %v688, %v689
        %691 = vadd.xlane.f32.xlu0 %v690
        %v692 = vpop.xlane.xlu0 %691
        %v693 = vrot.slane %v692, 4
        %v694 = vadd.f32 %v692, %v693
        %v695 = vrot.slane %v694, 2
        %v696 = vadd.f32 %v694, %v695
        %v697 = vrot.slane %v696, 1
        %v698 = vadd.f32 %v696, %v697
        %s699 = vtos %v698
        %v700 = vmul.f32 %v535, %v535
        %v701 = vmul.f32 %v536, %v536
        %v702 = vsel %vm582, %v700, 0.0
        %v703 = vsel %vm582, %v701, 0.0
        %v704 = vadd.f32 %v702, %v703
        %705 = vadd.xlane.f32.xlu0 %v704
        %v706 = vpop.xlane.xlu0 %705
        %v707 = vrot.slane %v706, 4
        %v708 = vadd.f32 %v706, %v707
        %v709 = vrot.slane %v708, 2
        %v710 = vadd.f32 %v708, %v709
        %v711 = vrot.slane %v710, 1
        %v712 = vadd.f32 %v710, %v711
        %s713 = vtos %v712
        %s714 = sadd.f32 %s699, %s713
        %v715 = vsel %vm582, %v670, 0.0
        %v716 = vsel %vm582, %v671, 0.0
        %v717 = vadd.f32 %v715, %v716
        %718 = vadd.xlane.f32.xlu0 %v717
        %v719 = vpop.xlane.xlu0 %718
        %v720 = vrot.slane %v719, 4
        %v721 = vadd.f32 %v719, %v720
        %v722 = vrot.slane %v721, 2
        %v723 = vadd.f32 %v721, %v722
        %v724 = vrot.slane %v723, 1
        %v725 = vadd.f32 %v723, %v724
        %s726 = vtos %v725
        %vm727 = vcmp.eq.s32.totalorder %v540, 1
        %vm728 = vcmp.eq.s32.totalorder %v541, 1
        %v729 = vsub.f32 %v576, %v527
        %v730 = vsub.f32 %v577, %v528
        %v731 = vsel %vm727, %v729, 0.0
        %v732 = vsel %vm728, %v730, 0.0
        %v733 = vsel %vm582, %v731, 0.0
        %v734 = vsel %vm582, %v732, 0.0
        %v735 = vadd.f32 %v733, %v734
        %736 = vadd.xlane.f32.xlu0 %v735
        %v737 = vpop.xlane.xlu0 %736
        %v738 = vrot.slane %v737, 4
        %v739 = vadd.f32 %v737, %v738
        %v740 = vrot.slane %v739, 2
        %v741 = vadd.f32 %v739, %v740
        %v742 = vrot.slane %v741, 1
        %v743 = vadd.f32 %v741, %v742
        %s744 = vtos %v743
        %v745 = vsel %vm727, 1, 0
        %v746 = vsel %vm728, 1, 0
        %v747 = vcvt.s32.f32 %v745
        %v748 = vcvt.s32.f32 %v746
        %v749 = vsel %vm582, %v747, 0.0
        %v750 = vsel %vm582, %v748, 0.0
        %v751 = vadd.f32 %v749, %v750
        %752 = vadd.xlane.f32.xlu0 %v751
        %v753 = vpop.xlane.xlu0 %752
        %v754 = vrot.slane %v753, 4
        %v755 = vadd.f32 %v753, %v754
        %v756 = vrot.slane %v755, 2
        %v757 = vadd.f32 %v755, %v756
        %v758 = vrot.slane %v757, 1
        %v759 = vadd.f32 %v757, %v758
        %s760 = vtos %v759
        %v761 = vmul.f32 %v561, %v569
        %v762 = vmul.f32 %v563, %v571
        %v763 = vmul.f32 %v761, %v538
        %v764 = vmul.f32 %v762, %v539
        %v765 = vsel %vm582, %v763, 0.0
        %v766 = vsel %vm582, %v764, 0.0
        %v767 = vadd.f32 %v765, %v766
        %768 = vadd.xlane.f32.xlu0 %v767
        %v769 = vpop.xlane.xlu0 %768
        %v770 = vrot.slane %v769, 4
        %v771 = vadd.f32 %v769, %v770
        %v772 = vrot.slane %v771, 2
        %v773 = vadd.f32 %v771, %v772
        %v774 = vrot.slane %v773, 1
        %v775 = vadd.f32 %v773, %v774
        %s776 = vtos %v775
        %v777 = vmul.f32 %v761, %v761
        %v778 = vmul.f32 %v762, %v762
        %v779 = vsel %vm582, %v777, 0.0
        %v780 = vsel %vm582, %v778, 0.0
        %v781 = vadd.f32 %v779, %v780
        %782 = vadd.xlane.f32.xlu0 %v781
        %v783 = vpop.xlane.xlu0 %782
        %v784 = vrot.slane %v783, 4
        %v785 = vadd.f32 %v783, %v784
        %v786 = vrot.slane %v785, 2
        %v787 = vadd.f32 %v785, %v786
        %v788 = vrot.slane %v787, 1
        %v789 = vadd.f32 %v787, %v788
        %s790 = vtos %v789
        %v791 = vmul.f32 %v538, %v538
        %v792 = vmul.f32 %v539, %v539
        %v793 = vsel %vm582, %v791, 0.0
        %v794 = vsel %vm582, %v792, 0.0
        %v795 = vadd.f32 %v793, %v794
        %796 = vadd.xlane.f32.xlu0 %v795
        %v797 = vpop.xlane.xlu0 %796
        %v798 = vrot.slane %v797, 4
        %v799 = vadd.f32 %v797, %v798
        %v800 = vrot.slane %v799, 2
        %v801 = vadd.f32 %v799, %v800
        %v802 = vrot.slane %v801, 1
        %v803 = vadd.f32 %v801, %v802
        %s804 = vtos %v803
        %s805 = sadd.f32 %s790, %s804
        %v806 = vsel %vm582, %v761, 0.0
        %v807 = vsel %vm582, %v762, 0.0
        %v808 = vadd.f32 %v806, %v807
        %809 = vadd.xlane.f32.xlu0 %v808
        %v810 = vpop.xlane.xlu0 %809
        %v811 = vrot.slane %v810, 4
        %v812 = vadd.f32 %v810, %v811
        %v813 = vrot.slane %v812, 2
        %v814 = vadd.f32 %v812, %v813
        %v815 = vrot.slane %v814, 1
        %v816 = vadd.f32 %v814, %v815
        %s817 = vtos %v816
        %vm818 = vcmp.eq.s32.totalorder %v540, 2
        %vm819 = vcmp.eq.s32.totalorder %v541, 2
        %v820 = vsub.f32 %v576, %v530
        %v821 = vsub.f32 %v577, %v531
        %v822 = vsel %vm818, %v820, 0.0
        %v823 = vsel %vm819, %v821, 0.0
        %v824 = vsel %vm582, %v822, 0.0
        %v825 = vsel %vm582, %v823, 0.0
        %v826 = vadd.f32 %v824, %v825
        %827 = vadd.xlane.f32.xlu0 %v826
        %v828 = vpop.xlane.xlu0 %827
        %v829 = vrot.slane %v828, 4
        %v830 = vadd.f32 %v828, %v829
        %v831 = vrot.slane %v830, 2
        %v832 = vadd.f32 %v830, %v831
        %v833 = vrot.slane %v832, 1
        %v834 = vadd.f32 %v832, %v833
        %s835 = vtos %v834
        %v836 = vsel %vm818, 1, 0
        %v837 = vsel %vm819, 1, 0
        %v838 = vcvt.s32.f32 %v836
        %v839 = vcvt.s32.f32 %v837
        %v840 = vsel %vm582, %v838, 0.0
        %v841 = vsel %vm582, %v839, 0.0
        %v842 = vadd.f32 %v840, %v841
        %843 = vadd.xlane.f32.xlu0 %v842
        %v844 = vpop.xlane.xlu0 %843
        %v845 = vrot.slane %v844, 4
        %v846 = vadd.f32 %v844, %v845
        %v847 = vrot.slane %v846, 2
        %v848 = vadd.f32 %v846, %v847
        %v849 = vrot.slane %v848, 1
        %v850 = vadd.f32 %v848, %v849
        %s851 = vtos %v850
        %v852 = vadd.f32 %v532, %v535
        %v853 = vadd.f32 %v533, %v536
        %v854 = vadd.f32 %v852, %v538
        %v855 = vadd.f32 %v853, %v539
        %v856 = vsub.f32 1.0, %v854
        %v857 = vsub.f32 1.0, %v855
        %860 = vrot.lane.b32.xlu0 %v856, 127
        %v861 = vpop.permute.xlu0 %860
        %862 = vrot.lane.b32.xlu0 %v857, 127
        %v863 = vpop.permute.xlu0 %862
        %vm866 = vcmask 56320
        %v867 = vsel %vm866, %v861, 0.0
        %v868 = vsel %vm866, %v863, 0.0
        %869 = vrot.lane.b32.xlu0 %v856, 1
        %v870 = vpop.permute.xlu0 %869
        %871 = vrot.lane.b32.xlu0 %v857, 1
        %v872 = vpop.permute.xlu0 %871
        %vm875 = vcmask 7168
        %v876 = vsel %vm875, 0.0, %v870
        %v877 = vsel %vm875, 0.0, %v872
        %v878 = vadd.f32 %v856, %v867
        %v879 = vadd.f32 %v857, %v868
        %v880 = vadd.f32 %v878, %v876
        %v881 = vadd.f32 %v879, %v877
        %vm884 = vcmask 1046528
        %v885 = vrot.slane %v880, 1
        %v886 = vrot.slane %v881, 1
        %v887 = vsel %vm884, %v885, %v886
        %v890 = vsel %vm884, %v886, 0.0
        %vm891 = vcmask 1040384
        %v892 = vrot.slane %v880, 7
        %v893 = vrot.slane %v881, 7
        %v894 = vsel %vm891, %v892, %v893
        %v897 = vsel %vm891, 0.0, %v892
        %v898 = vlaneseq
        %v899 = vshrl.u32 %v898, 7
        %v900 = vadd.s32 %v899, 8
        %vm901 = vcmp.lt.s32.totalorder %v899, 0
        %v902 = vsub.s32 0, %v899
        %v903 = vsel %vm901, %v902, %v899
        %v904 = vshrl.u32 %v903, 3
        %v905 = vand.u32 %v903, 7
        %v906 = vsub.s32 0, %v905
        %v907 = vsel %vm901, %v906, %v905
        %vm908 = vcmp.lt.s32.totalorder %v900, 0
        %v909 = vsub.s32 0, %v900
        %v910 = vsel %vm908, %v909, %v900
        %v911 = vshrl.u32 %v910, 3
        %v912 = vand.u32 %v910, 7
        %v913 = vsub.s32 0, %v912
        %v914 = vsel %vm908, %v913, %v912
        %vm915 = vcmp.ne.s32.totalorder %v907, 0
        %vm916 = vcmp.ne.s32.totalorder %v914, 0
        %vm917 = vcmp.lt.s32.totalorder %v907, 0
        %vm918 = vcmp.lt.s32.totalorder %v914, 0
        %vm919 = vmand %vm917, %vm915
        %vm920 = vmand %vm918, %vm916
        %v921 = vadd.s32 %v907, 8
        %v922 = vadd.s32 %v914, 8
        %v923 = vsel %vm919, %v921, %v907
        %v924 = vsel %vm920, %v922, %v914
        %vm925 = vcmp.lt.s32.totalorder %v923, 7
        %vm926 = vcmp.lt.s32.totalorder %v924, 7
        %v927 = vsel %vm925, 1, 0
        %v928 = vsel %vm926, 1, 0
        %vm929 = vcmp.eq.s32.totalorder %v927, 1
        %vm930 = vcmp.eq.s32.totalorder %v928, 1
        %v931 = vsel %vm929, %v887, 0.0
        %v932 = vsel %vm930, %v890, 0.0
        %vm933 = vcmp.ge.s32.totalorder %v923, 1
        %vm934 = vcmp.ge.s32.totalorder %v924, 1
        %v935 = vsel %vm933, 1, 0
        %v936 = vsel %vm934, 1, 0
        %vm937 = vcmp.eq.s32.totalorder %v935, 1
        %vm938 = vcmp.eq.s32.totalorder %v936, 1
        %v939 = vsel %vm937, %v897, 0.0
        %v940 = vsel %vm938, %v894, 0.0
        %v941 = vadd.f32 %v880, %v931
        %v942 = vadd.f32 %v881, %v932
        %v943 = vadd.f32 %v941, %v939
        %v944 = vadd.f32 %v942, %v940
        %p945 = scmp.gt.s32.totalorder %s30, 0
        %s946 = scalar_select %p945, 1, 0
        %s947 = scvt.s32.f32 %s946
        %v948 = vld [vmem:[%s444] sm:$0xff]
        %s949 = scalar_lea.vmem %s444, 8 [#allocation7]
        %v950 = vld [vmem:[%s949] sm:$0xff]
        %v951 = vadd.f32 %v948, %v950
        %s952 = scalar_lea.vmem %s444, 16 [#allocation7]
        %v953 = vld [vmem:[%s952] sm:$0xff]
        %v954 = vadd.f32 %v951, %v953
        %v955 = vsub.f32 1.0, %v954
        %957 = vrot.lane.b32.xlu0 %v955, 127
        %v958 = vpop.permute.xlu0 %957
        %v960 = vsel %vm866, %v958, 0.0
        %961 = vrot.lane.b32.xlu0 %v955, 1
        %v962 = vpop.permute.xlu0 %961
        %v964 = vsel %vm875, 0.0, %v962
        %v965 = vadd.f32 %v955, %v960
        %v966 = vadd.f32 %v965, %v964
        %v968 = vrot.slane %v966, 1
        %v970 = vsel %vm884, %v968, 0.0
        %v971 = vrot.slane %v966, 7
        %v973 = vsel %vm891, 0.0, %v971
        %v974 = vsel %vm929, %v970, 0.0
        %v975 = vsel %vm937, %v973, 0.0
        %v976 = vadd.f32 %v966, %v974
        %v977 = vadd.f32 %v976, %v975
        %v978 = vstv %s947
        %v979 = vmul.f32 %v977, %v978
        %p980 = scmp.lt.s32.totalorder %s30, 3
        %s981 = scalar_select %p980, 1, 0
        %s982 = scvt.s32.f32 %s981
        %v983 = vld [vmem:[%s453] sm:$0xff]
        %s984 = scalar_lea.vmem %s453, 8 [#allocation9]
        %v985 = vld [vmem:[%s984] sm:$0xff]
        %v986 = vadd.f32 %v983, %v985
        %s987 = scalar_lea.vmem %s453, 16 [#allocation9]
        %v988 = vld [vmem:[%s987] sm:$0xff]
        %v989 = vadd.f32 %v986, %v988
        %v990 = vsub.f32 1.0, %v989
        %992 = vrot.lane.b32.xlu0 %v990, 127
        %v993 = vpop.permute.xlu0 %992
        %v995 = vsel %vm866, %v993, 0.0
        %996 = vrot.lane.b32.xlu0 %v990, 1
        %v997 = vpop.permute.xlu0 %996
        %v999 = vsel %vm875, 0.0, %v997
        %v1000 = vadd.f32 %v990, %v995
        %v1001 = vadd.f32 %v1000, %v999
        %v1003 = vrot.slane %v1001, 1
        %v1005 = vsel %vm884, %v1003, 0.0
        %v1006 = vrot.slane %v1001, 7
        %v1008 = vsel %vm891, 0.0, %v1006
        %v1009 = vsel %vm929, %v1005, 0.0
        %v1010 = vsel %vm937, %v1008, 0.0
        %v1011 = vadd.f32 %v1001, %v1009
        %v1012 = vadd.f32 %v1011, %v1010
        %v1013 = vstv %s982
        %v1014 = vmul.f32 %v1012, %v1013
        %v1015 = vadd.f32 %v979, %v943
        %v1016 = vadd.f32 %v943, %v944
        %v1017 = vadd.f32 %v1015, %v944
        %v1018 = vadd.f32 %v1016, %v1014
        %v1019 = vmul.f32 %v856, 27.0
        %v1020 = vmul.f32 %v857, 27.0
        %v1021 = vsub.f32 %v1019, %v1017
        %v1022 = vsub.f32 %v1020, %v1018
        %v1023 = vand.u32 2147483647, %v1021
        %v1024 = vand.u32 2147483647, %v1022
        %v1025 = vsel %vm582, %v1023, 0.0
        %v1026 = vsel %vm582, %v1024, 0.0
        %v1027 = vadd.f32 %v1025, %v1026
        %1028 = vadd.xlane.f32.xlu0 %v1027
        %v1029 = vpop.xlane.xlu0 %1028
        %v1030 = vrot.slane %v1029, 4
        %v1031 = vadd.f32 %v1029, %v1030
        %v1032 = vrot.slane %v1031, 2
        %v1033 = vadd.f32 %v1031, %v1032
        %v1034 = vrot.slane %v1033, 1
        %v1035 = vadd.f32 %v1033, %v1034
        %s1036 = vtos %v1035
        %vm1037 = vcmp.eq.s32.totalorder %v899, 0
        %vm1038 = vcmp.eq.s32.totalorder %v900, 0
        %v1039 = vsel %vm1037, 1, 0
        %v1040 = vsel %vm1038, 1, 0
        %vm1041 = vcmp.eq.s32.totalorder %v1039, 1
        %vm1042 = vcmp.eq.s32.totalorder %v1040, 1
        %v1043 = vstv %s594
        %v1044 = vsel %vm1041, %v1043, 0.0
        %v1045 = vsel %vm1042, %v1043, 0.0
        %vm1046 = vcmp.eq.s32.totalorder %v899, 1
        %vm1047 = vcmp.eq.s32.totalorder %v900, 1
        %v1048 = vsel %vm1046, 1, 0
        %v1049 = vsel %vm1047, 1, 0
        %vm1050 = vcmp.eq.s32.totalorder %v1048, 1
        %vm1051 = vcmp.eq.s32.totalorder %v1049, 1
        %v1052 = vstv %s685
        %v1053 = vsel %vm1050, %v1052, %v1044
        %v1054 = vsel %vm1051, %v1052, %v1045
        %vm1055 = vcmp.eq.s32.totalorder %v899, 2
        %vm1056 = vcmp.eq.s32.totalorder %v900, 2
        %v1057 = vsel %vm1055, 1, 0
        %v1058 = vsel %vm1056, 1, 0
        %vm1059 = vcmp.eq.s32.totalorder %v1057, 1
        %vm1060 = vcmp.eq.s32.totalorder %v1058, 1
        %v1061 = vstv %s776
        %v1062 = vsel %vm1059, %v1061, %v1053
        %v1063 = vsel %vm1060, %v1061, %v1054
        %vm1064 = vcmp.eq.s32.totalorder %v899, 3
        %vm1065 = vcmp.eq.s32.totalorder %v900, 3
        %v1066 = vsel %vm1064, 1, 0
        %v1067 = vsel %vm1065, 1, 0
        %vm1068 = vcmp.eq.s32.totalorder %v1066, 1
        %vm1069 = vcmp.eq.s32.totalorder %v1067, 1
        %v1070 = vstv %s623
        %v1071 = vsel %vm1068, %v1070, %v1062
        %v1072 = vsel %vm1069, %v1070, %v1063
        %vm1073 = vcmp.eq.s32.totalorder %v899, 4
        %vm1074 = vcmp.eq.s32.totalorder %v900, 4
        %v1075 = vsel %vm1073, 1, 0
        %v1076 = vsel %vm1074, 1, 0
        %vm1077 = vcmp.eq.s32.totalorder %v1075, 1
        %vm1078 = vcmp.eq.s32.totalorder %v1076, 1
        %v1079 = vstv %s714
        %v1080 = vsel %vm1077, %v1079, %v1071
        %v1081 = vsel %vm1078, %v1079, %v1072
        %vm1082 = vcmp.eq.s32.totalorder %v899, 5
        %vm1083 = vcmp.eq.s32.totalorder %v900, 5
        %v1084 = vsel %vm1082, 1, 0
        %v1085 = vsel %vm1083, 1, 0
        %vm1086 = vcmp.eq.s32.totalorder %v1084, 1
        %vm1087 = vcmp.eq.s32.totalorder %v1085, 1
        %v1088 = vstv %s805
        %v1089 = vsel %vm1086, %v1088, %v1080
        %v1090 = vsel %vm1087, %v1088, %v1081
        %vm1091 = vcmp.eq.s32.totalorder %v899, 6
        %vm1092 = vcmp.eq.s32.totalorder %v900, 6
        %v1093 = vsel %vm1091, 1, 0
        %v1094 = vsel %vm1092, 1, 0
        %vm1095 = vcmp.eq.s32.totalorder %v1093, 1
        %vm1096 = vcmp.eq.s32.totalorder %v1094, 1
        %v1097 = vstv %s635
        %v1098 = vsel %vm1095, %v1097, %v1089
        %v1099 = vsel %vm1096, %v1097, %v1090
        %vm1100 = vcmp.eq.s32.totalorder %v899, 7
        %vm1101 = vcmp.eq.s32.totalorder %v900, 7
        %v1102 = vsel %vm1100, 1, 0
        %v1103 = vsel %vm1101, 1, 0
        %vm1104 = vcmp.eq.s32.totalorder %v1102, 1
        %vm1105 = vcmp.eq.s32.totalorder %v1103, 1
        %v1106 = vstv %s726
        %v1107 = vsel %vm1104, %v1106, %v1098
        %v1108 = vsel %vm1105, %v1106, %v1099
        %vm1109 = vcmp.eq.s32.totalorder %v899, 8
        %vm1110 = vcmp.eq.s32.totalorder %v900, 8
        %v1111 = vsel %vm1109, 1, 0
        %v1112 = vsel %vm1110, 1, 0
        %vm1113 = vcmp.eq.s32.totalorder %v1111, 1
        %vm1114 = vcmp.eq.s32.totalorder %v1112, 1
        %v1115 = vstv %s817
        %v1116 = vsel %vm1113, %v1115, %v1107
        %v1117 = vsel %vm1114, %v1115, %v1108
        %vm1118 = vcmp.eq.s32.totalorder %v899, 9
        %vm1119 = vcmp.eq.s32.totalorder %v900, 9
        %v1120 = vsel %vm1118, 1, 0
        %v1121 = vsel %vm1119, 1, 0
        %vm1122 = vcmp.eq.s32.totalorder %v1120, 1
        %vm1123 = vcmp.eq.s32.totalorder %v1121, 1
        %v1124 = vstv %s653
        %v1125 = vsel %vm1122, %v1124, %v1116
        %v1126 = vsel %vm1123, %v1124, %v1117
        %vm1127 = vcmp.eq.s32.totalorder %v899, 10
        %vm1128 = vcmp.eq.s32.totalorder %v900, 10
        %v1129 = vsel %vm1127, 1, 0
        %v1130 = vsel %vm1128, 1, 0
        %vm1131 = vcmp.eq.s32.totalorder %v1129, 1
        %vm1132 = vcmp.eq.s32.totalorder %v1130, 1
        %v1133 = vstv %s744
        %v1134 = vsel %vm1131, %v1133, %v1125
        %v1135 = vsel %vm1132, %v1133, %v1126
        %vm1136 = vcmp.eq.s32.totalorder %v899, 11
        %vm1137 = vcmp.eq.s32.totalorder %v900, 11
        %v1138 = vsel %vm1136, 1, 0
        %v1139 = vsel %vm1137, 1, 0
        %vm1140 = vcmp.eq.s32.totalorder %v1138, 1
        %vm1141 = vcmp.eq.s32.totalorder %v1139, 1
        %v1142 = vstv %s835
        %v1143 = vsel %vm1140, %v1142, %v1134
        %v1144 = vsel %vm1141, %v1142, %v1135
        %vm1145 = vcmp.eq.s32.totalorder %v899, 12
        %vm1146 = vcmp.eq.s32.totalorder %v900, 12
        %v1147 = vsel %vm1145, 1, 0
        %v1148 = vsel %vm1146, 1, 0
        %vm1149 = vcmp.eq.s32.totalorder %v1147, 1
        %vm1150 = vcmp.eq.s32.totalorder %v1148, 1
        %v1151 = vstv %s669
        %v1152 = vsel %vm1149, %v1151, %v1143
        %v1153 = vsel %vm1150, %v1151, %v1144
        %vm1154 = vcmp.eq.s32.totalorder %v899, 13
        %vm1155 = vcmp.eq.s32.totalorder %v900, 13
        %v1156 = vsel %vm1154, 1, 0
        %v1157 = vsel %vm1155, 1, 0
        %vm1158 = vcmp.eq.s32.totalorder %v1156, 1
        %vm1159 = vcmp.eq.s32.totalorder %v1157, 1
        %v1160 = vstv %s760
        %v1161 = vsel %vm1158, %v1160, %v1152
        %v1162 = vsel %vm1159, %v1160, %v1153
        %vm1163 = vcmp.eq.s32.totalorder %v899, 14
        %vm1164 = vcmp.eq.s32.totalorder %v900, 14
        %v1165 = vsel %vm1163, 1, 0
        %v1166 = vsel %vm1164, 1, 0
        %vm1167 = vcmp.eq.s32.totalorder %v1165, 1
        %vm1168 = vcmp.eq.s32.totalorder %v1166, 1
        %v1169 = vstv %s851
        %v1170 = vsel %vm1167, %v1169, %v1161
        %v1171 = vsel %vm1168, %v1169, %v1162
        %vm1172 = vcmp.eq.s32.totalorder %v899, 15
        %vm1173 = vcmp.eq.s32.totalorder %v900, 15
        %v1174 = vsel %vm1172, 1, 0
        %v1175 = vsel %vm1173, 1, 0
        %vm1176 = vcmp.eq.s32.totalorder %v1174, 1
        %vm1177 = vcmp.eq.s32.totalorder %v1175, 1
        %v1178 = vstv %s1036
        %v1179 = vsel %vm1176, %v1178, %v1170
        %v1180 = vsel %vm1177, %v1178, %v1171
        %1181 = vst [vmem:[%s523] sm:$0xff] %v1179
        %1182 = vst [vmem:[%s523 + $0x8] sm:$0xff] %v1180
        %p1183 = scmp.lt.s32.totalorder %s29, 1
        %s1184 = scalar_select %p1183, %s29, 1
        %p1185 = scmp.lt.s32.totalorder %s30, 3
        %s1186 = scalar_select %p1185, %s30, 3
        %s1187 = smul.addr %s1186, 2
        %s1188 = smul.addr %s1184, 8
        %s1189 = sadd.s32 %s1187, %s1188
        %s1190 = smul.addr %s1189, 8
        %s1191 = scalar_lea.vmem %s5, %s1190
        // Predicated region
        $region61: #{unified_segmentation_loss.1} parent=39 // pred_check
          %p1192 = pneg %p213
        $region62: #{unified_segmentation_loss.1} parent=39 // pred_check_branch
          %1194 = sbr.rel (%p1192) target = $region64
        $region63: #{unified_segmentation_loss.1} parent=39 // pred_region
          _
        $region64: #{unified_segmentation_loss.1} parent=39 // pred_fallthru
          _
      $region40: #{unified_segmentation_loss.1} parent=5 // pred_fallthru
        _
      %p1195 = scmp.le.s32.totalorder 2, %s20
      // Predicated region
      $region65: #{unified_segmentation_loss.1} parent=5 // pred_check
        %p1196 = pneg %p1195
      $region66: #{unified_segmentation_loss.1} parent=5 // pred_check_branch
        %1198 = sbr.rel (%p1196) target = $region68
      $region67: #{unified_segmentation_loss.1} parent=5 // pred_region
        %s1199 = ssub.s32 %s20, 2
        // Predicated region
        $region69: #{unified_segmentation_loss.1} parent=67 // pred_check
          %p1200 = pneg %p219
        $region70: #{unified_segmentation_loss.1} parent=67 // pred_check_branch
          %1202 = sbr.rel (%p1200) target = $region72
        $region71: #{unified_segmentation_loss.1} parent=67 // pred_region
          %p1203 = scmp.lt.s32.totalorder %s31, 1
          %s1204 = scalar_select %p1203, %s31, 1
          %p1205 = scmp.lt.s32.totalorder %s32, 3
          %s1206 = scalar_select %p1205, %s32, 3
          %s1207 = smul.addr %s1206, 2
          %s1208 = smul.addr %s1204, 8
          %s1209 = sadd.s32 %s1207, %s1208
          %s1210 = smul.addr %s1209, 8
          %s1211 = scalar_lea.vmem %s5, %s1210
        $region72: #{unified_segmentation_loss.1} parent=67 // pred_fallthru
          _
      $region68: #{unified_segmentation_loss.1} parent=5 // pred_fallthru
        _
    $region6: #{unified_segmentation_loss.1} parent=1 // loop_footer
      %s24 = sadd.s32 1, %s20
    $region7: #{unified_segmentation_loss.1} parent=1 // loop_footer_branch
      %19 = sbr.rel target = $region3
    $region8: #{unified_segmentation_loss.1} parent=1 // loop_exit
      _
    %1212 = vsyncpa [#allocation3], 1
    %s1213 = scalar_lea.sflag [#allocation3], 1
    %1214 = vsyncpa %s1213, 1
    %1215 = vsyncpa [#allocation5], 1
    %s1216 = scalar_lea.sflag [#allocation5], 1
    %1217 = vsyncpa %s1216, 1
    %1218 = vsyncpa [#allocation8], 1
    %s1219 = scalar_lea.sflag [#allocation8], 1
    %1220 = vsyncpa %s1219, 1

</llo_original>
